<compile_context>
chip_gen: v6e
topology: v6e:2x2x1
jax: 0.10.0
libtpu: 0.0.40
codegen_flags: <defaults>
</compile_context>

<pallas_src>
import numpy as np
import jax
import jax.numpy as jnp
from jax.experimental import pallas as pl
from jax.experimental.pallas import tpu as pltpu


# ----------------------------------------------------------------------------
# Host-side helpers (tiny, computed at trace time with numpy)
# ----------------------------------------------------------------------------
def _interp_matrix(in_size, out_size):
    """(out_size, in_size) matrix for 1-D bilinear interp, align_corners=True."""
    m = np.zeros((out_size, in_size), np.float32)
    if out_size == 1:
        m[0, 0] = 1.0
        return m
    scale = (in_size - 1) / (out_size - 1) if in_size > 1 else 0.0
    for o in range(out_size):
        src = o * scale
        i0 = min(max(int(np.floor(src)), 0), in_size - 1)
        i1 = min(i0 + 1, in_size - 1)
        t = src - i0
        m[o, i0] += 1.0 - t
        m[o, i1] += t
    return m


def _banded_conv_weights(w_hwio, Wp, Wo):
    """Per-kh banded (Toeplitz) weight matrices for lane-packed conv.

    Result[kh] has shape (Wp*Cin, Wo*Cout) so that
      out[oh, ow*Cout+co] = sum_kh  packed_in[oh+kh, :] @ Result[kh]
    equals the stride-1 cross-correlation (PyTorch Conv2d semantics).
    """
    KH, KW, Cin, Cout = w_hwio.shape
    mats = np.zeros((KH, Wp * Cin, Wo * Cout), np.float32)
    for kh in range(KH):
        for ow in range(Wo):
            for kw in range(KW):
                wi = ow + kw
                mats[kh, wi * Cin:(wi + 1) * Cin,
                     ow * Cout:(ow + 1) * Cout] = w_hwio[kh, kw]
    return mats


# ----------------------------------------------------------------------------
# Fused kernel (one batch element per grid step)
# ----------------------------------------------------------------------------
def _make_fused_kernel(*, k, pad1, pad2, Cin, C1, Ca, C2,
                       Hup, Wup, Ho1, Wo1, h, w, xy1, xy2, Ho2, Wo2):
    WupC = Wup * Cin

    def kernel(x_ref, a_ref, mh_ref, mwk_ref, w1_ref, b1_ref,
               w2y_ref, w2a_ref, b2_ref, o_ref,
               p1_ref, p2y_ref, p2a_ref):
        # ---- bilinear upsample (align_corners=True) as two matmuls --------
        x = x_ref[0]                                          # (Hin, Win*Cin)
        t0 = jnp.dot(mh_ref[...], x, preferred_element_type=jnp.float32)
        up = jnp.dot(t0, mwk_ref[...], preferred_element_type=jnp.float32)
        # up: (Hup, Wup*Cin), lane-packed channel-last

        # ---- zero-pad for Conv1 entirely in VMEM ---------------------------
        p1_ref[...] = jnp.zeros(p1_ref.shape, jnp.float32)
        p1_ref[pad1:pad1 + Hup, pad1 * Cin:pad1 * Cin + WupC] = up

        # ---- Conv1 + bias + ReLU (KH banded matmuls, lane-packed output) --
        acc1 = jnp.zeros((Ho1, Wo1 * C1), jnp.float32)
        for kh in range(k):                                   # static unroll
            acc1 = acc1 + jnp.dot(p1_ref[kh:kh + Ho1, :], w1_ref[kh],
                                  preferred_element_type=jnp.float32)
        y1 = jnp.maximum(acc1 + b1_ref[...], 0.0)             # (Ho1, Wo1*C1)

        # ---- center crop + zero-pad for Conv2 (y1 branch) ------------------
        p2y_ref[...] = jnp.zeros(p2y_ref.shape, jnp.float32)
        p2y_ref[pad2:pad2 + h, pad2 * C1:pad2 * C1 + w * C1] = (
            y1[xy2:xy2 + h, xy1 * C1:(xy1 + w) * C1])

        # ---- zero-pad the skip-connection branch ---------------------------
        p2a_ref[...] = jnp.zeros(p2a_ref.shape, jnp.float32)
        p2a_ref[pad2:pad2 + h, pad2 * Ca:pad2 * Ca + w * Ca] = a_ref[0]

        # ---- Conv2 over the *virtual* concat (channel-split) + bias + ReLU -
        acc2 = jnp.zeros((Ho2, Wo2 * C2), jnp.float32)
        for kh in range(k):
            acc2 = acc2 + jnp.dot(p2y_ref[kh:kh + Ho2, :], w2y_ref[kh],
                                  preferred_element_type=jnp.float32)
            acc2 = acc2 + jnp.dot(p2a_ref[kh:kh + Ho2, :], w2a_ref[kh],
                                  preferred_element_type=jnp.float32)
        o_ref[0] = jnp.maximum(acc2 + b2_ref[...], 0.0).astype(o_ref.dtype)

    return kernel


# ----------------------------------------------------------------------------
# Module wrapper
# ----------------------------------------------------------------------------
class UNetTransitionUpPallas:
    """Pallas/JAX port of UNet_TransitionUp (float32, NCHW interface)."""

    def __init__(self, in_channel, append_channel, scale_factor, kernel_size, key):
        self.scale = scale_factor
        self.k = kernel_size
        self.pad1 = max(int((kernel_size - 1) / 2), 1) + 1
        self.pad2 = max(int((kernel_size - 1) / 2), 1)
        c_cat = in_channel + append_channel
        c_out = int(c_cat / 2)
        self.c_in = in_channel
        self.c_app = append_channel
        self.c_out = c_out

        k1, k2, k3, k4 = jax.random.split(key, 4)
        fan1 = in_channel * kernel_size * kernel_size
        fan2 = c_cat * kernel_size * kernel_size
        lim1 = 1.0 / np.sqrt(fan1)
        lim2 = 1.0 / np.sqrt(fan2)
        # PyTorch conv weight layout is OIHW.
        self.w1_oihw = jax.random.uniform(
            k1, (in_channel, in_channel, kernel_size, kernel_size),
            jnp.float32, -lim1, lim1)
        self.b1 = jax.random.uniform(k2, (in_channel,), jnp.float32, -lim1, lim1)
        self.w2_oihw = jax.random.uniform(
            k3, (c_out, c_cat, kernel_size, kernel_size),
            jnp.float32, -lim2, lim2)
        self.b2 = jax.random.uniform(k4, (c_out,), jnp.float32, -lim2, lim2)
        # HWIO views (host numpy) for the banded-matrix construction.
        self.w1_hwio = np.asarray(jnp.transpose(self.w1_oihw, (2, 3, 1, 0)))
        self.w2_hwio = np.asarray(jnp.transpose(self.w2_oihw, (2, 3, 1, 0)))

    def __call__(self, X_nchw, Append_nchw):
        N, Cin, Hin, Win = X_nchw.shape
        _, Ca, Ha, Wa = Append_nchw.shape
        k, pad1, pad2 = self.k, self.pad1, self.pad2
        C1, C2 = self.c_in, self.c_out

        # static geometry
        Hup, Wup = Hin * self.scale, Win * self.scale
        H1p, W1p = Hup + 2 * pad1, Wup + 2 * pad1
        Ho1, Wo1 = H1p - k + 1, W1p - k + 1
        h, w = Ha, Wa
        xy1 = (Wo1 - w) // 2
        xy2 = (Ho1 - h) // 2
        H2p, W2p = h + 2 * pad2, w + 2 * pad2
        Ho2, Wo2 = H2p - k + 1, W2p - k + 1

        # host-side packed operands (tiny; built at trace time)
        mh = _interp_matrix(Hin, Hup)
        mw = _interp_matrix(Win, Wup)
        mwk = np.kron(mw.T, np.eye(Cin, dtype=np.float32)).astype(np.float32)
        w1_band = _banded_conv_weights(self.w1_hwio, W1p, Wo1)
        w2y_band = _banded_conv_weights(self.w2_hwio[:, :, :C1, :], W2p, Wo2)
        w2a_band = _banded_conv_weights(self.w2_hwio[:, :, C1:, :], W2p, Wo2)
        b1_pk = np.tile(np.asarray(self.b1), Wo1)[None].astype(np.float32)
        b2_pk = np.tile(np.asarray(self.b2), Wo2)[None].astype(np.float32)

        # lane-packed (N, rows, W*C) views of the inputs
        x_pk = jnp.transpose(X_nchw.astype(jnp.float32),
                             (0, 2, 3, 1)).reshape(N, Hin, Win * Cin)
        a_pk = jnp.transpose(Append_nchw.astype(jnp.float32),
                             (0, 2, 3, 1)).reshape(N, Ha, Wa * Ca)

        kernel = _make_fused_kernel(
            k=k, pad1=pad1, pad2=pad2, Cin=Cin, C1=C1, Ca=Ca, C2=C2,
            Hup=Hup, Wup=Wup, Ho1=Ho1, Wo1=Wo1,
            h=h, w=w, xy1=xy1, xy2=xy2, Ho2=Ho2, Wo2=Wo2)

        out_packed = pl.pallas_call(
            kernel,
            out_shape=jax.ShapeDtypeStruct((N, Ho2, Wo2 * C2), jnp.float32),
            grid_spec=pltpu.PrefetchScalarGridSpec(
                num_scalar_prefetch=0,
                grid=(N,),
                in_specs=[
                    pl.BlockSpec((1, Hin, Win * Cin), lambda n: (n, 0, 0)),
                    pl.BlockSpec((1, Ha, Wa * Ca), lambda n: (n, 0, 0)),
                    pl.BlockSpec((Hup, Hin), lambda n: (0, 0)),
                    pl.BlockSpec((Win * Cin, Wup * Cin), lambda n: (0, 0)),
                    pl.BlockSpec((k, W1p * Cin, Wo1 * C1), lambda n: (0, 0, 0)),
                    pl.BlockSpec((1, Wo1 * C1), lambda n: (0, 0)),
                    pl.BlockSpec((k, W2p * C1, Wo2 * C2), lambda n: (0, 0, 0)),
                    pl.BlockSpec((k, W2p * Ca, Wo2 * C2), lambda n: (0, 0, 0)),
                    pl.BlockSpec((1, Wo2 * C2), lambda n: (0, 0)),
                ],
                out_specs=pl.BlockSpec((1, Ho2, Wo2 * C2), lambda n: (n, 0, 0)),
                scratch_shapes=[
                    pltpu.VMEM((H1p, W1p * Cin), jnp.float32),  # padded conv1 in
                    pltpu.VMEM((H2p, W2p * C1), jnp.float32),   # cropped+padded y1
                    pltpu.VMEM((H2p, W2p * Ca), jnp.float32),   # padded append
                ],
            ),
            compiler_params=pltpu.CompilerParams(
                dimension_semantics=("parallel",)),   # v7x: 2nd TC gets batch 1
        )(x_pk, a_pk, jnp.asarray(mh), jnp.asarray(mwk),
          jnp.asarray(w1_band), jnp.asarray(b1_pk),
          jnp.asarray(w2y_band), jnp.asarray(w2a_band), jnp.asarray(b2_pk))

        out = out_packed.reshape(N, Ho2, Wo2, C2)
        return jnp.transpose(out, (0, 3, 1, 2))      # back to NCHW


# ----------------------------------------------------------------------------
# Pure-JAX reference (lax.conv + gather-based upsample) for correctness check
# ----------------------------------------------------------------------------
def _upsample_bilinear_align_corners_nhwc(x_nhwc, scale):
    N, H, W, C = x_nhwc.shape
    Ho, Wo = H * scale, W * scale

    def axis_interp(x, in_size, out_size, axis):
        if out_size == 1:
            src = jnp.zeros((1,), jnp.float32)
        else:
            src = jnp.arange(out_size, dtype=jnp.float32) * (
                (in_size - 1) / (out_size - 1) if in_size > 1 else 0.0)
        i0 = jnp.clip(jnp.floor(src).astype(jnp.int32), 0, in_size - 1)
        i1 = jnp.minimum(i0 + 1, in_size - 1)
        t = src - i0.astype(jnp.float32)
        x0 = jnp.take(x, i0, axis=axis)
        x1 = jnp.take(x, i1, axis=axis)
        shape = [1] * x.ndim
        shape[axis] = out_size
        t = t.reshape(shape)
        return x0 * (1.0 - t) + x1 * t

    y = axis_interp(x_nhwc, H, Ho, axis=1)
    y = axis_interp(y, W, Wo, axis=2)
    return y


def _reference(mod, X, A):
    x = X.astype(jnp.float32)
    a = A.astype(jnp.float32)
    up = jnp.transpose(
        _upsample_bilinear_align_corners_nhwc(
            jnp.transpose(x, (0, 2, 3, 1)), mod.scale),
        (0, 3, 1, 2))
    c1 = jax.lax.conv_general_dilated(
        up, mod.w1_oihw, (1, 1), [(mod.pad1, mod.pad1)] * 2,
        dimension_numbers=('NCHW', 'OIHW', 'NCHW'))
    c1 = jax.nn.relu(c1 + mod.b1[None, :, None, None])
    h, w = a.shape[2], a.shape[3]
    H1, W1 = c1.shape[2], c1.shape[3]
    xy1 = (W1 - w) // 2
    xy2 = (H1 - h) // 2
    cat = jnp.concatenate([c1[:, :, xy2:xy2 + h, xy1:xy1 + w], a], axis=1)
    c2 = jax.lax.conv_general_dilated(
        cat, mod.w2_oihw, (1, 1), [(mod.pad2, mod.pad2)] * 2,
        dimension_numbers=('NCHW', 'OIHW', 'NCHW'))
    return jax.nn.relu(c2 + mod.b2[None, :, None, None])


if __name__ == "__main__":
    key = jax.random.PRNGKey(0)
    kx, ka, kp = jax.random.split(key, 3)

    in_channel, append_channel, scale_factor, kernel_size = 4, 4, 2, 3
    X = jax.random.normal(kx, (2, in_channel, 8, 8), jnp.float32)        # NCHW
    A = jax.random.normal(ka, (2, append_channel, 16, 16), jnp.float32)  # NCHW

    mod = UNetTransitionUpPallas(in_channel, append_channel, scale_factor,
                                 kernel_size, kp)
    out = mod(X, A)
    out = jax.block_until_ready(out)
    assert out.shape == (2, (in_channel + append_channel) // 2, 16, 16)

    ref = _reference(mod, X, A)
    np.testing.assert_allclose(np.asarray(out), np.asarray(ref),
                               rtol=1e-4, atol=1e-4)
    print("KERNEL_OK")
</pallas_src>

<mosaic_0001>
module attributes {stable_mosaic.version = 11 : i64} {
  func.func @kernel(%arg0: i32, %arg1: memref<1x8x32xf32, #tpu.memory_space<vmem>>, %arg2: memref<1x16x64xf32, #tpu.memory_space<vmem>>, %arg3: memref<16x8xf32, #tpu.memory_space<vmem>>, %arg4: memref<32x64xf32, #tpu.memory_space<vmem>>, %arg5: memref<3x80x72xf32, #tpu.memory_space<vmem>>, %arg6: memref<1x72xf32, #tpu.memory_space<vmem>>, %arg7: memref<3x72x64xf32, #tpu.memory_space<vmem>>, %arg8: memref<3x72x64xf32, #tpu.memory_space<vmem>>, %arg9: memref<1x64xf32, #tpu.memory_space<vmem>>, %arg10: memref<1x16x64xf32, #tpu.memory_space<vmem>>, %arg11: memref<20x80xf32, #tpu.memory_space<vmem>>, %arg12: memref<18x72xf32, #tpu.memory_space<vmem>>, %arg13: memref<18x72xf32, #tpu.memory_space<vmem>>) attributes {dimension_semantics = [#tpu.dimension_semantics<parallel>], iteration_bounds = array<i64: 2>, scalar_prefetch = 0 : i64, scratch_operands = 3 : i64, tpu.core_type = #tpu.core_type<tc>, window_params = [{transform_indices = @transform_0, window_bounds = array<i64: 1, 8, 32>}, {transform_indices = @transform_1, window_bounds = array<i64: 1, 16, 64>}, {pipeline_mode = #tpu.pipeline_mode<synchronous>, transform_indices = @transform_2, window_bounds = array<i64: 16, 8>}, {pipeline_mode = #tpu.pipeline_mode<synchronous>, transform_indices = @transform_3, window_bounds = array<i64: 32, 64>}, {pipeline_mode = #tpu.pipeline_mode<synchronous>, transform_indices = @transform_4, window_bounds = array<i64: 3, 80, 72>}, {pipeline_mode = #tpu.pipeline_mode<synchronous>, transform_indices = @transform_5, window_bounds = array<i64: 1, 72>}, {pipeline_mode = #tpu.pipeline_mode<synchronous>, transform_indices = @transform_6, window_bounds = array<i64: 3, 72, 64>}, {pipeline_mode = #tpu.pipeline_mode<synchronous>, transform_indices = @transform_7, window_bounds = array<i64: 3, 72, 64>}, {pipeline_mode = #tpu.pipeline_mode<synchronous>, transform_indices = @transform_8, window_bounds = array<i64: 1, 64>}, {transform_indices = @transform_9, window_bounds = array<i64: 1, 16, 64>}]} {
    %c0 = arith.constant 0 : index
    %c0_0 = arith.constant 0 : index
    %c0_1 = arith.constant 0 : index
    %0 = vector.load %arg1[%c0, %c0_0, %c0_1] : memref<1x8x32xf32, #tpu.memory_space<vmem>>, vector<1x8x32xf32>
    %1 = vector.shape_cast %0 : vector<1x8x32xf32> to vector<8x32xf32>
    %c0_2 = arith.constant 0 : index
    %c0_3 = arith.constant 0 : index
    %2 = vector.load %arg3[%c0_2, %c0_3] : memref<16x8xf32, #tpu.memory_space<vmem>>, vector<16x8xf32>
    %cst = arith.constant dense<0.000000e+00> : vector<16x32xf32>
    %3 = tpu.matmul %2, %1, %cst {dimension_numbers = #tpu.dot_dimension_numbers<[1], [0], [0], [1], [0, 0, 1, 1], [], []>} : vector<16x8xf32>, vector<8x32xf32>, vector<16x32xf32> -> vector<16x32xf32>
    %c0_4 = arith.constant 0 : index
    %c0_5 = arith.constant 0 : index
    %4 = vector.load %arg4[%c0_4, %c0_5] : memref<32x64xf32, #tpu.memory_space<vmem>>, vector<32x64xf32>
    %cst_6 = arith.constant dense<0.000000e+00> : vector<16x64xf32>
    %5 = tpu.matmul %3, %4, %cst_6 {dimension_numbers = #tpu.dot_dimension_numbers<[1], [0], [0], [1], [0, 0, 1, 1], [], []>} : vector<16x32xf32>, vector<32x64xf32>, vector<16x64xf32> -> vector<16x64xf32>
    %cst_7 = arith.constant 0.000000e+00 : f32
    %6 = vector.broadcast %cst_7 : f32 to vector<20x80xf32>
    %c0_8 = arith.constant 0 : index
    %c0_9 = arith.constant 0 : index
    %7 = vector.load %arg11[%c0_8, %c0_9] : memref<20x80xf32, #tpu.memory_space<vmem>>, vector<20x80xf32>
    tpu.vector_store %arg11[%c0_8, %c0_9], %6 {strides = array<i32>} : memref<20x80xf32, #tpu.memory_space<vmem>>, vector<20x80xf32>,
    %c2 = arith.constant 2 : index
    %c8 = arith.constant 8 : index
    %8 = vector.load %arg11[%c2, %c8] : memref<20x80xf32, #tpu.memory_space<vmem>>, vector<16x64xf32>
    tpu.vector_store %arg11[%c2, %c8], %5 {strides = array<i32>} : memref<20x80xf32, #tpu.memory_space<vmem>>, vector<16x64xf32>,
    %cst_10 = arith.constant 0.000000e+00 : f32
    %9 = vector.broadcast %cst_10 : f32 to vector<18x72xf32>
    %c0_11 = arith.constant 0 : index
    %c0_12 = arith.constant 0 : index
    %10 = vector.load %arg11[%c0_11, %c0_12] : memref<20x80xf32, #tpu.memory_space<vmem>>, vector<18x80xf32>
    %c0_13 = arith.constant 0 : index
    %c0_14 = arith.constant 0 : index
    %c0_15 = arith.constant 0 : index
    %11 = vector.load %arg5[%c0_13, %c0_14, %c0_15] : memref<3x80x72xf32, #tpu.memory_space<vmem>>, vector<1x80x72xf32>
    %12 = vector.shape_cast %11 : vector<1x80x72xf32> to vector<80x72xf32>
    %cst_16 = arith.constant dense<0.000000e+00> : vector<18x72xf32>
    %13 = tpu.matmul %10, %12, %cst_16 {dimension_numbers = #tpu.dot_dimension_numbers<[1], [0], [0], [1], [0, 0, 1, 1], [], []>} : vector<18x80xf32>, vector<80x72xf32>, vector<18x72xf32> -> vector<18x72xf32>
    %14 = arith.addf %9, %13 : vector<18x72xf32>
    %c1 = arith.constant 1 : index
    %c0_17 = arith.constant 0 : index
    %15 = vector.load %arg11[%c1, %c0_17] : memref<20x80xf32, #tpu.memory_space<vmem>>, vector<18x80xf32>
    %c1_18 = arith.constant 1 : index
    %c0_19 = arith.constant 0 : index
    %c0_20 = arith.constant 0 : index
    %16 = vector.load %arg5[%c1_18, %c0_19, %c0_20] : memref<3x80x72xf32, #tpu.memory_space<vmem>>, vector<1x80x72xf32>
    %17 = vector.shape_cast %16 : vector<1x80x72xf32> to vector<80x72xf32>
    %cst_21 = arith.constant dense<0.000000e+00> : vector<18x72xf32>
    %18 = tpu.matmul %15, %17, %cst_21 {dimension_numbers = #tpu.dot_dimension_numbers<[1], [0], [0], [1], [0, 0, 1, 1], [], []>} : vector<18x80xf32>, vector<80x72xf32>, vector<18x72xf32> -> vector<18x72xf32>
    %19 = arith.addf %14, %18 : vector<18x72xf32>
    %c2_22 = arith.constant 2 : index
    %c0_23 = arith.constant 0 : index
    %20 = vector.load %arg11[%c2_22, %c0_23] : memref<20x80xf32, #tpu.memory_space<vmem>>, vector<18x80xf32>
    %c2_24 = arith.constant 2 : index
    %c0_25 = arith.constant 0 : index
    %c0_26 = arith.constant 0 : index
    %21 = vector.load %arg5[%c2_24, %c0_25, %c0_26] : memref<3x80x72xf32, #tpu.memory_space<vmem>>, vector<1x80x72xf32>
    %22 = vector.shape_cast %21 : vector<1x80x72xf32> to vector<80x72xf32>
    %cst_27 = arith.constant dense<0.000000e+00> : vector<18x72xf32>
    %23 = tpu.matmul %20, %22, %cst_27 {dimension_numbers = #tpu.dot_dimension_numbers<[1], [0], [0], [1], [0, 0, 1, 1], [], []>} : vector<18x80xf32>, vector<80x72xf32>, vector<18x72xf32> -> vector<18x72xf32>
    %24 = arith.addf %19, %23 : vector<18x72xf32>
    %c0_28 = arith.constant 0 : index
    %c0_29 = arith.constant 0 : index
    %25 = vector.load %arg6[%c0_28, %c0_29] : memref<1x72xf32, #tpu.memory_space<vmem>>, vector<1x72xf32>
    %26 = vector.broadcast %25 : vector<1x72xf32> to vector<18x72xf32>
    %27 = arith.addf %24, %26 : vector<18x72xf32>
    %cst_30 = arith.constant 0.000000e+00 : f32
    %28 = vector.broadcast %cst_30 : f32 to vector<18x72xf32>
    %29 = arith.maximumf %27, %28 : vector<18x72xf32>
    %cst_31 = arith.constant 0.000000e+00 : f32
    %30 = vector.broadcast %cst_31 : f32 to vector<18x72xf32>
    %c0_32 = arith.constant 0 : index
    %c0_33 = arith.constant 0 : index
    %31 = vector.load %arg12[%c0_32, %c0_33] : memref<18x72xf32, #tpu.memory_space<vmem>>, vector<18x72xf32>
    tpu.vector_store %arg12[%c0_32, %c0_33], %30 {strides = array<i32>} : memref<18x72xf32, #tpu.memory_space<vmem>>, vector<18x72xf32>,
    %32 = vector.extract_strided_slice %29 {offsets = [1, 4], sizes = [16, 64], strides = [1, 1]} : vector<18x72xf32> to vector<16x64xf32>
    %c1_34 = arith.constant 1 : index
    %c4 = arith.constant 4 : index
    %33 = vector.load %arg12[%c1_34, %c4] : memref<18x72xf32, #tpu.memory_space<vmem>>, vector<16x64xf32>
    tpu.vector_store %arg12[%c1_34, %c4], %32 {strides = array<i32>} : memref<18x72xf32, #tpu.memory_space<vmem>>, vector<16x64xf32>,
    %cst_35 = arith.constant 0.000000e+00 : f32
    %34 = vector.broadcast %cst_35 : f32 to vector<18x72xf32>
    %c0_36 = arith.constant 0 : index
    %c0_37 = arith.constant 0 : index
    %35 = vector.load %arg13[%c0_36, %c0_37] : memref<18x72xf32, #tpu.memory_space<vmem>>, vector<18x72xf32>
    tpu.vector_store %arg13[%c0_36, %c0_37], %34 {strides = array<i32>} : memref<18x72xf32, #tpu.memory_space<vmem>>, vector<18x72xf32>,
    %c0_38 = arith.constant 0 : index
    %c0_39 = arith.constant 0 : index
    %c0_40 = arith.constant 0 : index
    %36 = vector.load %arg2[%c0_38, %c0_39, %c0_40] : memref<1x16x64xf32, #tpu.memory_space<vmem>>, vector<1x16x64xf32>
    %37 = vector.shape_cast %36 : vector<1x16x64xf32> to vector<16x64xf32>
    %c1_41 = arith.constant 1 : index
    %c4_42 = arith.constant 4 : index
    %38 = vector.load %arg13[%c1_41, %c4_42] : memref<18x72xf32, #tpu.memory_space<vmem>>, vector<16x64xf32>
    tpu.vector_store %arg13[%c1_41, %c4_42], %37 {strides = array<i32>} : memref<18x72xf32, #tpu.memory_space<vmem>>, vector<16x64xf32>,
    %cst_43 = arith.constant 0.000000e+00 : f32
    %39 = vector.broadcast %cst_43 : f32 to vector<16x64xf32>
    %c0_44 = arith.constant 0 : index
    %c0_45 = arith.constant 0 : index
    %40 = vector.load %arg12[%c0_44, %c0_45] : memref<18x72xf32, #tpu.memory_space<vmem>>, vector<16x72xf32>
    %c0_46 = arith.constant 0 : index
    %c0_47 = arith.constant 0 : index
    %c0_48 = arith.constant 0 : index
    %41 = vector.load %arg7[%c0_46, %c0_47, %c0_48] : memref<3x72x64xf32, #tpu.memory_space<vmem>>, vector<1x72x64xf32>
    %42 = vector.shape_cast %41 : vector<1x72x64xf32> to vector<72x64xf32>
    %cst_49 = arith.constant dense<0.000000e+00> : vector<16x64xf32>
    %43 = tpu.matmul %40, %42, %cst_49 {dimension_numbers = #tpu.dot_dimension_numbers<[1], [0], [0], [1], [0, 0, 1, 1], [], []>} : vector<16x72xf32>, vector<72x64xf32>, vector<16x64xf32> -> vector<16x64xf32>
    %44 = arith.addf %39, %43 : vector<16x64xf32>
    %c0_50 = arith.constant 0 : index
    %c0_51 = arith.constant 0 : index
    %45 = vector.load %arg13[%c0_50, %c0_51] : memref<18x72xf32, #tpu.memory_space<vmem>>, vector<16x72xf32>
    %c0_52 = arith.constant 0 : index
    %c0_53 = arith.constant 0 : index
    %c0_54 = arith.constant 0 : index
    %46 = vector.load %arg8[%c0_52, %c0_53, %c0_54] : memref<3x72x64xf32, #tpu.memory_space<vmem>>, vector<1x72x64xf32>
    %47 = vector.shape_cast %46 : vector<1x72x64xf32> to vector<72x64xf32>
    %cst_55 = arith.constant dense<0.000000e+00> : vector<16x64xf32>
    %48 = tpu.matmul %45, %47, %cst_55 {dimension_numbers = #tpu.dot_dimension_numbers<[1], [0], [0], [1], [0, 0, 1, 1], [], []>} : vector<16x72xf32>, vector<72x64xf32>, vector<16x64xf32> -> vector<16x64xf32>
    %49 = arith.addf %44, %48 : vector<16x64xf32>
    %c1_56 = arith.constant 1 : index
    %c0_57 = arith.constant 0 : index
    %50 = vector.load %arg12[%c1_56, %c0_57] : memref<18x72xf32, #tpu.memory_space<vmem>>, vector<16x72xf32>
    %c1_58 = arith.constant 1 : index
    %c0_59 = arith.constant 0 : index
    %c0_60 = arith.constant 0 : index
    %51 = vector.load %arg7[%c1_58, %c0_59, %c0_60] : memref<3x72x64xf32, #tpu.memory_space<vmem>>, vector<1x72x64xf32>
    %52 = vector.shape_cast %51 : vector<1x72x64xf32> to vector<72x64xf32>
    %cst_61 = arith.constant dense<0.000000e+00> : vector<16x64xf32>
    %53 = tpu.matmul %50, %52, %cst_61 {dimension_numbers = #tpu.dot_dimension_numbers<[1], [0], [0], [1], [0, 0, 1, 1], [], []>} : vector<16x72xf32>, vector<72x64xf32>, vector<16x64xf32> -> vector<16x64xf32>
    %54 = arith.addf %49, %53 : vector<16x64xf32>
    %c1_62 = arith.constant 1 : index
    %c0_63 = arith.constant 0 : index
    %55 = vector.load %arg13[%c1_62, %c0_63] : memref<18x72xf32, #tpu.memory_space<vmem>>, vector<16x72xf32>
    %c1_64 = arith.constant 1 : index
    %c0_65 = arith.constant 0 : index
    %c0_66 = arith.constant 0 : index
    %56 = vector.load %arg8[%c1_64, %c0_65, %c0_66] : memref<3x72x64xf32, #tpu.memory_space<vmem>>, vector<1x72x64xf32>
    %57 = vector.shape_cast %56 : vector<1x72x64xf32> to vector<72x64xf32>
    %cst_67 = arith.constant dense<0.000000e+00> : vector<16x64xf32>
    %58 = tpu.matmul %55, %57, %cst_67 {dimension_numbers = #tpu.dot_dimension_numbers<[1], [0], [0], [1], [0, 0, 1, 1], [], []>} : vector<16x72xf32>, vector<72x64xf32>, vector<16x64xf32> -> vector<16x64xf32>
    %59 = arith.addf %54, %58 : vector<16x64xf32>
    %c2_68 = arith.constant 2 : index
    %c0_69 = arith.constant 0 : index
    %60 = vector.load %arg12[%c2_68, %c0_69] : memref<18x72xf32, #tpu.memory_space<vmem>>, vector<16x72xf32>
    %c2_70 = arith.constant 2 : index
    %c0_71 = arith.constant 0 : index
    %c0_72 = arith.constant 0 : index
    %61 = vector.load %arg7[%c2_70, %c0_71, %c0_72] : memref<3x72x64xf32, #tpu.memory_space<vmem>>, vector<1x72x64xf32>
    %62 = vector.shape_cast %61 : vector<1x72x64xf32> to vector<72x64xf32>
    %cst_73 = arith.constant dense<0.000000e+00> : vector<16x64xf32>
    %63 = tpu.matmul %60, %62, %cst_73 {dimension_numbers = #tpu.dot_dimension_numbers<[1], [0], [0], [1], [0, 0, 1, 1], [], []>} : vector<16x72xf32>, vector<72x64xf32>, vector<16x64xf32> -> vector<16x64xf32>
    %64 = arith.addf %59, %63 : vector<16x64xf32>
    %c2_74 = arith.constant 2 : index
    %c0_75 = arith.constant 0 : index
    %65 = vector.load %arg13[%c2_74, %c0_75] : memref<18x72xf32, #tpu.memory_space<vmem>>, vector<16x72xf32>
    %c2_76 = arith.constant 2 : index
    %c0_77 = arith.constant 0 : index
    %c0_78 = arith.constant 0 : index
    %66 = vector.load %arg8[%c2_76, %c0_77, %c0_78] : memref<3x72x64xf32, #tpu.memory_space<vmem>>, vector<1x72x64xf32>
    %67 = vector.shape_cast %66 : vector<1x72x64xf32> to vector<72x64xf32>
    %cst_79 = arith.constant dense<0.000000e+00> : vector<16x64xf32>
    %68 = tpu.matmul %65, %67, %cst_79 {dimension_numbers = #tpu.dot_dimension_numbers<[1], [0], [0], [1], [0, 0, 1, 1], [], []>} : vector<16x72xf32>, vector<72x64xf32>, vector<16x64xf32> -> vector<16x64xf32>
    %69 = arith.addf %64, %68 : vector<16x64xf32>
    %c0_80 = arith.constant 0 : index
    %c0_81 = arith.constant 0 : index
    %70 = vector.load %arg9[%c0_80, %c0_81] : memref<1x64xf32, #tpu.memory_space<vmem>>, vector<1x64xf32>
    %71 = vector.broadcast %70 : vector<1x64xf32> to vector<16x64xf32>
    %72 = arith.addf %69, %71 : vector<16x64xf32>
    %cst_82 = arith.constant 0.000000e+00 : f32
    %73 = vector.broadcast %cst_82 : f32 to vector<16x64xf32>
    %74 = arith.maximumf %72, %73 : vector<16x64xf32>
    %c0_83 = arith.constant 0 : index
    %c0_84 = arith.constant 0 : index
    %c0_85 = arith.constant 0 : index
    %75 = vector.load %arg10[%c0_83, %c0_84, %c0_85] : memref<1x16x64xf32, #tpu.memory_space<vmem>>, vector<1x16x64xf32>
    %76 = vector.shape_cast %75 : vector<1x16x64xf32> to vector<16x64xf32>
    %77 = vector.shape_cast %74 : vector<16x64xf32> to vector<1x16x64xf32>
    tpu.vector_store %arg10[%c0_83, %c0_84, %c0_85], %77 {strides = array<i32>} : memref<1x16x64xf32, #tpu.memory_space<vmem>>, vector<1x16x64xf32>,
    return
  }
  func.func @transform_0(%arg0: i32) -> (i32, i32, i32) {
    %c0_i32 = arith.constant 0 : i32
    %c0_i32_0 = arith.constant 0 : i32
    %c0_i32_1 = arith.constant 0 : i32
    return %arg0, %c0_i32, %c0_i32_0 : i32, i32, i32
  }
  func.func @transform_1(%arg0: i32) -> (i32, i32, i32) {
    %c0_i32 = arith.constant 0 : i32
    %c0_i32_0 = arith.constant 0 : i32
    %c0_i32_1 = arith.constant 0 : i32
    return %arg0, %c0_i32, %c0_i32_0 : i32, i32, i32
  }
  func.func @transform_2(%arg0: i32) -> (i32, i32) {
    %c0_i32 = arith.constant 0 : i32
    %c0_i32_0 = arith.constant 0 : i32
    %c0_i32_1 = arith.constant 0 : i32
    return %c0_i32, %c0_i32_0 : i32, i32
  }
  func.func @transform_3(%arg0: i32) -> (i32, i32) {
    %c0_i32 = arith.constant 0 : i32
    %c0_i32_0 = arith.constant 0 : i32
    %c0_i32_1 = arith.constant 0 : i32
    return %c0_i32, %c0_i32_0 : i32, i32
  }
  func.func @transform_4(%arg0: i32) -> (i32, i32, i32) {
    %c0_i32 = arith.constant 0 : i32
    %c0_i32_0 = arith.constant 0 : i32
    %c0_i32_1 = arith.constant 0 : i32
    %c0_i32_2 = arith.constant 0 : i32
    return %c0_i32, %c0_i32_0, %c0_i32_1 : i32, i32, i32
  }
  func.func @transform_5(%arg0: i32) -> (i32, i32) {
    %c0_i32 = arith.constant 0 : i32
    %c0_i32_0 = arith.constant 0 : i32
    %c0_i32_1 = arith.constant 0 : i32
    return %c0_i32, %c0_i32_0 : i32, i32
  }
  func.func @transform_6(%arg0: i32) -> (i32, i32, i32) {
    %c0_i32 = arith.constant 0 : i32
    %c0_i32_0 = arith.constant 0 : i32
    %c0_i32_1 = arith.constant 0 : i32
    %c0_i32_2 = arith.constant 0 : i32
    return %c0_i32, %c0_i32_0, %c0_i32_1 : i32, i32, i32
  }
  func.func @transform_7(%arg0: i32) -> (i32, i32, i32) {
    %c0_i32 = arith.constant 0 : i32
    %c0_i32_0 = arith.constant 0 : i32
    %c0_i32_1 = arith.constant 0 : i32
    %c0_i32_2 = arith.constant 0 : i32
    return %c0_i32, %c0_i32_0, %c0_i32_1 : i32, i32, i32
  }
  func.func @transform_8(%arg0: i32) -> (i32, i32) {
    %c0_i32 = arith.constant 0 : i32
    %c0_i32_0 = arith.constant 0 : i32
    %c0_i32_1 = arith.constant 0 : i32
    return %c0_i32, %c0_i32_0 : i32, i32
  }
  func.func @transform_9(%arg0: i32) -> (i32, i32, i32) {
    %c0_i32 = arith.constant 0 : i32
    %c0_i32_0 = arith.constant 0 : i32
    %c0_i32_1 = arith.constant 0 : i32
    return %arg0, %c0_i32, %c0_i32_0 : i32, i32, i32
  }
}

</mosaic_0001>

<llo_original>
// kernel: tpu_custom_call.1
$region0: #{tpu_custom_call.1}
  #allocation0 [shape = 'u32[]', space=smem, size = 0x4, offset = 0x4, fixed_abs, tag = 'smem constant byte address 0x4 - core index']
  #allocation1 [shape = 'u32[144,128]{1,0:T(1,128)}', space=vmem, size = 0x12000, scoped, tag = 'internal scratch']
  #allocation2 [shape = 'f32[20,80]{1,0:T(8,128)}', space=vmem, size = 0x3000, scoped, tag = 'scratch operand']
  #allocation3 [shape = 'f32[18,72]{1,0:T(8,128)}', space=vmem, size = 0x3000, scoped, tag = 'scratch operand']
  #allocation4 [shape = 'f32[18,72]{1,0:T(8,128)}', space=vmem, size = 0x3000, scoped, tag = 'scratch operand']
  %s0 = inlined_call_operand.vmem [shape: f32[2,8,32], index: 0, kind: input, shape index: {}]
  %s1 = inlined_call_operand.vmem [shape: f32[2,16,64], index: 1, kind: input, shape index: {}]
  %s2 = inlined_call_operand.vmem [shape: f32[16,8], index: 2, kind: input, shape index: {}]
  %s3 = inlined_call_operand.vmem [shape: f32[32,64], index: 3, kind: input, shape index: {}]
  %s4 = inlined_call_operand.vmem [shape: f32[3,80,72], index: 4, kind: input, shape index: {}]
  %s5 = inlined_call_operand.vmem [shape: f32[1,72], index: 5, kind: input, shape index: {}]
  %s6 = inlined_call_operand.vmem [shape: f32[3,72,64], index: 6, kind: input, shape index: {}]
  %s7 = inlined_call_operand.vmem [shape: f32[3,72,64], index: 7, kind: input, shape index: {}]
  %s8 = inlined_call_operand.vmem [shape: f32[1,64], index: 8, kind: input, shape index: {}]
  %s9 = inlined_call_operand.hbm [shape: f32[2,16,64], index: 9, kind: output, shape index: {}]
  %s10 = sld [smem:[#allocation0]]
  $region69: #{tpu_custom_call.1} parent=0
    _
  %s12 = ssub.s32 1, %s10
  %s13 = scalar_select 0, %s12, %s10
  $region1: #{tpu_custom_call.1} parent=0
    #allocation5 [shape = 'u8[16384]{0}', space=vmem, size = 0x4000, scoped, tag = 'output window, operand 0']
    #allocation6 [shape = 's32[2]{0}', space=sflag, size = 0x8, scoped, tag = 'scoped memory for tpu_custom_call.1']
    %14 = vsyncpa [#allocation6], 0
    %s15 = scalar_lea.sflag [#allocation6], 1
    %16 = vsyncpa %s15, 0
    loop: start=0, step=1, limit=4
    $region2: #{tpu_custom_call.1} parent=1 // loop_pre_header
      _
    $region3: #{tpu_custom_call.1} parent=1 // loop_header
      %s18 = sphi 0, %s22
      %p19 = scmp.ge.s32.totalorder %s18, 4
      %s28 = sphi 0, %s30
      %s31 = sphi 0, %s28
      %s32 = sphi 0, %s31
      %s48 = sphi 0, %s32
      %s54 = sphi 0, %s56
      %s57 = sphi 0, %s54
      %s58 = sphi 0, %s57
      %s74 = sphi 0, %s58
      %s78 = sphi 0, %s78
      %s80 = sphi 0, %s78
      %s81 = sphi 0, %s80
      %s95 = sphi 0, %s81
      %s99 = sphi 0, %s99
      %s101 = sphi 0, %s99
      %s102 = sphi 0, %s101
      %s116 = sphi 0, %s102
      %s120 = sphi 0, %s120
      %s122 = sphi 0, %s120
      %s123 = sphi 0, %s122
      %s137 = sphi 0, %s123
      %s141 = sphi 0, %s141
      %s143 = sphi 0, %s141
      %s144 = sphi 0, %s143
      %s158 = sphi 0, %s144
      %s162 = sphi 0, %s162
      %s164 = sphi 0, %s162
      %s165 = sphi 0, %s164
      %s179 = sphi 0, %s165
      %s183 = sphi 0, %s183
      %s185 = sphi 0, %s183
      %s186 = sphi 0, %s185
      %s200 = sphi 0, %s186
      %s204 = sphi 0, %s204
      %s206 = sphi 0, %s204
      %s207 = sphi 0, %s206
      %s221 = sphi 0, %s207
      %s227 = sphi 0, %s229
      %s230 = sphi 0, %s227
      %s231 = sphi 0, %s230
      %s247 = sphi 0, %s231
    $region4: #{tpu_custom_call.1} parent=1 // loop_header_branch
      %21 = sbr.rel (%p19) target = $region8
    $region5: #{tpu_custom_call.1} parent=1 // loop_body
      %s23 = ssub.s32 %s18, 1
      %s24 = ssub.s32 %s18, 2
      %s25 = sadd.s32 %s18, 1
      %s26 = ssub.s32 %s18, %s25
      %p27 = scmp.eq.s32.totalorder %s26, 0
      %s29 = sadd.s32 %s28, 1
      %s30 = scalar_select %p27, %s28, %s29
      %p33 = pneg %p27
      %p34 = scmp.eq.s32.totalorder %s18, 1
      %p35 = por %p33, %p34
      %p36 = scmp.ne.s32.totalorder %s28, %s31
      %p37 = scmp.eq.s32.totalorder %s18, 0
      %p38 = por %p36, %p37
      %p39 = scmp.ne.s32.totalorder %s28, %s31
      %p40 = scmp.eq.s32.totalorder %s23, 1
      %p41 = por %p39, %p40
      %p42 = scmp.ne.s32.totalorder %s31, %s32
      %p43 = scmp.eq.s32.totalorder %s23, 0
      %p44 = por %p42, %p43
      %p45 = scmp.ne.s32.totalorder %s31, %s32
      %p46 = scmp.eq.s32.totalorder %s24, 1
      %p47 = por %p45, %p46
      %p49 = scmp.ne.s32.totalorder %s32, %s48
      %p50 = scmp.eq.s32.totalorder %s24, 0
      %p51 = por %p49, %p50
      %s52 = ssub.s32 %s18, %s25
      %p53 = scmp.eq.s32.totalorder %s52, 0
      %s55 = sadd.s32 %s54, 1
      %s56 = scalar_select %p53, %s54, %s55
      %p59 = pneg %p53
      %p60 = scmp.eq.s32.totalorder %s18, 1
      %p61 = por %p59, %p60
      %p62 = scmp.ne.s32.totalorder %s54, %s57
      %p63 = scmp.eq.s32.totalorder %s18, 0
      %p64 = por %p62, %p63
      %p65 = scmp.ne.s32.totalorder %s54, %s57
      %p66 = scmp.eq.s32.totalorder %s23, 1
      %p67 = por %p65, %p66
      %p68 = scmp.ne.s32.totalorder %s57, %s58
      %p69 = scmp.eq.s32.totalorder %s23, 0
      %p70 = por %p68, %p69
      %p71 = scmp.ne.s32.totalorder %s57, %s58
      %p72 = scmp.eq.s32.totalorder %s24, 1
      %p73 = por %p71, %p72
      %p75 = scmp.ne.s32.totalorder %s58, %s74
      %p76 = scmp.eq.s32.totalorder %s24, 0
      %p77 = por %p75, %p76
      %s79 = sadd.s32 %s78, 1
      %p82 = scmp.eq.s32.totalorder %s18, 1
      %p83 = scmp.ne.s32.totalorder %s78, %s80
      %p84 = scmp.eq.s32.totalorder %s18, 0
      %p85 = por %p83, %p84
      %p86 = scmp.ne.s32.totalorder %s78, %s80
      %p87 = scmp.eq.s32.totalorder %s23, 1
      %p88 = por %p86, %p87
      %p89 = scmp.ne.s32.totalorder %s80, %s81
      %p90 = scmp.eq.s32.totalorder %s23, 0
      %p91 = por %p89, %p90
      %p92 = scmp.ne.s32.totalorder %s80, %s81
      %p93 = scmp.eq.s32.totalorder %s24, 1
      %p94 = por %p92, %p93
      %p96 = scmp.ne.s32.totalorder %s81, %s95
      %p97 = scmp.eq.s32.totalorder %s24, 0
      %p98 = por %p96, %p97
      %s100 = sadd.s32 %s99, 1
      %p103 = scmp.eq.s32.totalorder %s18, 1
      %p104 = scmp.ne.s32.totalorder %s99, %s101
      %p105 = scmp.eq.s32.totalorder %s18, 0
      %p106 = por %p104, %p105
      %p107 = scmp.ne.s32.totalorder %s99, %s101
      %p108 = scmp.eq.s32.totalorder %s23, 1
      %p109 = por %p107, %p108
      %p110 = scmp.ne.s32.totalorder %s101, %s102
      %p111 = scmp.eq.s32.totalorder %s23, 0
      %p112 = por %p110, %p111
      %p113 = scmp.ne.s32.totalorder %s101, %s102
      %p114 = scmp.eq.s32.totalorder %s24, 1
      %p115 = por %p113, %p114
      %p117 = scmp.ne.s32.totalorder %s102, %s116
      %p118 = scmp.eq.s32.totalorder %s24, 0
      %p119 = por %p117, %p118
      %s121 = sadd.s32 %s120, 1
      %p124 = scmp.eq.s32.totalorder %s18, 1
      %p125 = scmp.ne.s32.totalorder %s120, %s122
      %p126 = scmp.eq.s32.totalorder %s18, 0
      %p127 = por %p125, %p126
      %p128 = scmp.ne.s32.totalorder %s120, %s122
      %p129 = scmp.eq.s32.totalorder %s23, 1
      %p130 = por %p128, %p129
      %p131 = scmp.ne.s32.totalorder %s122, %s123
      %p132 = scmp.eq.s32.totalorder %s23, 0
      %p133 = por %p131, %p132
      %p134 = scmp.ne.s32.totalorder %s122, %s123
      %p135 = scmp.eq.s32.totalorder %s24, 1
      %p136 = por %p134, %p135
      %p138 = scmp.ne.s32.totalorder %s123, %s137
      %p139 = scmp.eq.s32.totalorder %s24, 0
      %p140 = por %p138, %p139
      %s142 = sadd.s32 %s141, 1
      %p145 = scmp.eq.s32.totalorder %s18, 1
      %p146 = scmp.ne.s32.totalorder %s141, %s143
      %p147 = scmp.eq.s32.totalorder %s18, 0
      %p148 = por %p146, %p147
      %p149 = scmp.ne.s32.totalorder %s141, %s143
      %p150 = scmp.eq.s32.totalorder %s23, 1
      %p151 = por %p149, %p150
      %p152 = scmp.ne.s32.totalorder %s143, %s144
      %p153 = scmp.eq.s32.totalorder %s23, 0
      %p154 = por %p152, %p153
      %p155 = scmp.ne.s32.totalorder %s143, %s144
      %p156 = scmp.eq.s32.totalorder %s24, 1
      %p157 = por %p155, %p156
      %p159 = scmp.ne.s32.totalorder %s144, %s158
      %p160 = scmp.eq.s32.totalorder %s24, 0
      %p161 = por %p159, %p160
      %s163 = sadd.s32 %s162, 1
      %p166 = scmp.eq.s32.totalorder %s18, 1
      %p167 = scmp.ne.s32.totalorder %s162, %s164
      %p168 = scmp.eq.s32.totalorder %s18, 0
      %p169 = por %p167, %p168
      %p170 = scmp.ne.s32.totalorder %s162, %s164
      %p171 = scmp.eq.s32.totalorder %s23, 1
      %p172 = por %p170, %p171
      %p173 = scmp.ne.s32.totalorder %s164, %s165
      %p174 = scmp.eq.s32.totalorder %s23, 0
      %p175 = por %p173, %p174
      %p176 = scmp.ne.s32.totalorder %s164, %s165
      %p177 = scmp.eq.s32.totalorder %s24, 1
      %p178 = por %p176, %p177
      %p180 = scmp.ne.s32.totalorder %s165, %s179
      %p181 = scmp.eq.s32.totalorder %s24, 0
      %p182 = por %p180, %p181
      %s184 = sadd.s32 %s183, 1
      %p187 = scmp.eq.s32.totalorder %s18, 1
      %p188 = scmp.ne.s32.totalorder %s183, %s185
      %p189 = scmp.eq.s32.totalorder %s18, 0
      %p190 = por %p188, %p189
      %p191 = scmp.ne.s32.totalorder %s183, %s185
      %p192 = scmp.eq.s32.totalorder %s23, 1
      %p193 = por %p191, %p192
      %p194 = scmp.ne.s32.totalorder %s185, %s186
      %p195 = scmp.eq.s32.totalorder %s23, 0
      %p196 = por %p194, %p195
      %p197 = scmp.ne.s32.totalorder %s185, %s186
      %p198 = scmp.eq.s32.totalorder %s24, 1
      %p199 = por %p197, %p198
      %p201 = scmp.ne.s32.totalorder %s186, %s200
      %p202 = scmp.eq.s32.totalorder %s24, 0
      %p203 = por %p201, %p202
      %s205 = sadd.s32 %s204, 1
      %p208 = scmp.eq.s32.totalorder %s18, 1
      %p209 = scmp.ne.s32.totalorder %s204, %s206
      %p210 = scmp.eq.s32.totalorder %s18, 0
      %p211 = por %p209, %p210
      %p212 = scmp.ne.s32.totalorder %s204, %s206
      %p213 = scmp.eq.s32.totalorder %s23, 1
      %p214 = por %p212, %p213
      %p215 = scmp.ne.s32.totalorder %s206, %s207
      %p216 = scmp.eq.s32.totalorder %s23, 0
      %p217 = por %p215, %p216
      %p218 = scmp.ne.s32.totalorder %s206, %s207
      %p219 = scmp.eq.s32.totalorder %s24, 1
      %p220 = por %p218, %p219
      %p222 = scmp.ne.s32.totalorder %s207, %s221
      %p223 = scmp.eq.s32.totalorder %s24, 0
      %p224 = por %p222, %p223
      %s225 = ssub.s32 %s18, %s25
      %p226 = scmp.eq.s32.totalorder %s225, 0
      %s228 = sadd.s32 %s227, 1
      %s229 = scalar_select %p226, %s227, %s228
      %p232 = pneg %p226
      %p233 = scmp.eq.s32.totalorder %s18, 1
      %p234 = por %p232, %p233
      %p235 = scmp.ne.s32.totalorder %s227, %s230
      %p236 = scmp.eq.s32.totalorder %s18, 0
      %p237 = por %p235, %p236
      %p238 = scmp.ne.s32.totalorder %s227, %s230
      %p239 = scmp.eq.s32.totalorder %s23, 1
      %p240 = por %p238, %p239
      %p241 = scmp.ne.s32.totalorder %s230, %s231
      %p242 = scmp.eq.s32.totalorder %s23, 0
      %p243 = por %p241, %p242
      %p244 = scmp.ne.s32.totalorder %s230, %s231
      %p245 = scmp.eq.s32.totalorder %s24, 1
      %p246 = por %p244, %p245
      %p248 = scmp.ne.s32.totalorder %s231, %s247
      %p249 = scmp.eq.s32.totalorder %s24, 0
      %p250 = por %p248, %p249
      %p251 = scmp.le.s32.totalorder 1, %s18
      %p252 = scmp.lt.s32.totalorder %s18, 3
      %p253 = pnand %p251, %p252
      %p254 = pneg %p253
      // Predicated region
      $region9: #{tpu_custom_call.1} parent=5 // pred_check
        _
      $region10: #{tpu_custom_call.1} parent=5 // pred_check_branch
        %256 = sbr.rel (%p253) target = $region12
      $region11: #{tpu_custom_call.1} parent=5 // pred_region
        %s257 = ssub.s32 %s18, 1
        // Predicated region
        $region13: #{tpu_custom_call.1} parent=11 // pred_check
          %p258 = pneg %p91
        $region14: #{tpu_custom_call.1} parent=11 // pred_check_branch
          %260 = sbr.rel (%p258) target = $region16
        $region15: #{tpu_custom_call.1} parent=11 // pred_region
          _
        $region16: #{tpu_custom_call.1} parent=11 // pred_fallthru
          _
        // Predicated region
        $region17: #{tpu_custom_call.1} parent=11 // pred_check
          %p261 = pneg %p112
        $region18: #{tpu_custom_call.1} parent=11 // pred_check_branch
          %263 = sbr.rel (%p261) target = $region20
        $region19: #{tpu_custom_call.1} parent=11 // pred_region
          _
        $region20: #{tpu_custom_call.1} parent=11 // pred_fallthru
          _
        // Predicated region
        $region21: #{tpu_custom_call.1} parent=11 // pred_check
          %p264 = pneg %p133
        $region22: #{tpu_custom_call.1} parent=11 // pred_check_branch
          %266 = sbr.rel (%p264) target = $region24
        $region23: #{tpu_custom_call.1} parent=11 // pred_region
          _
        $region24: #{tpu_custom_call.1} parent=11 // pred_fallthru
          _
        // Predicated region
        $region25: #{tpu_custom_call.1} parent=11 // pred_check
          %p267 = pneg %p154
        $region26: #{tpu_custom_call.1} parent=11 // pred_check_branch
          %269 = sbr.rel (%p267) target = $region28
        $region27: #{tpu_custom_call.1} parent=11 // pred_region
          _
        $region28: #{tpu_custom_call.1} parent=11 // pred_fallthru
          _
        // Predicated region
        $region29: #{tpu_custom_call.1} parent=11 // pred_check
          %p270 = pneg %p175
        $region30: #{tpu_custom_call.1} parent=11 // pred_check_branch
          %272 = sbr.rel (%p270) target = $region32
        $region31: #{tpu_custom_call.1} parent=11 // pred_region
          _
        $region32: #{tpu_custom_call.1} parent=11 // pred_fallthru
          _
        // Predicated region
        $region33: #{tpu_custom_call.1} parent=11 // pred_check
          %p273 = pneg %p196
        $region34: #{tpu_custom_call.1} parent=11 // pred_check_branch
          %275 = sbr.rel (%p273) target = $region36
        $region35: #{tpu_custom_call.1} parent=11 // pred_region
          _
        $region36: #{tpu_custom_call.1} parent=11 // pred_fallthru
          _
        // Predicated region
        $region37: #{tpu_custom_call.1} parent=11 // pred_check
          %p276 = pneg %p217
        $region38: #{tpu_custom_call.1} parent=11 // pred_check_branch
          %278 = sbr.rel (%p276) target = $region40
        $region39: #{tpu_custom_call.1} parent=11 // pred_region
          _
        $region40: #{tpu_custom_call.1} parent=11 // pred_fallthru
          _
      $region12: #{tpu_custom_call.1} parent=5 // pred_fallthru
        _
      %p279 = scmp.lt.s32.totalorder %s18, 2
      // Predicated region
      $region41: #{tpu_custom_call.1} parent=5 // pred_check
        %p280 = pneg %p279
      $region42: #{tpu_custom_call.1} parent=5 // pred_check_branch
        %282 = sbr.rel (%p280) target = $region44
      $region43: #{tpu_custom_call.1} parent=5 // pred_region
        // Predicated region
        $region45: #{tpu_custom_call.1} parent=43 // pred_check
          %p283 = pneg %p38
        $region46: #{tpu_custom_call.1} parent=43 // pred_check_branch
          %285 = sbr.rel (%p283) target = $region48
        $region47: #{tpu_custom_call.1} parent=43 // pred_region
          %p286 = scmp.lt.s32.totalorder %s18, 1
          %s287 = scalar_select %p286, %s18, 1
          %s288 = smul.addr %s287, 8
          %s289 = scalar_lea.vmem %s0, %s288
        $region48: #{tpu_custom_call.1} parent=43 // pred_fallthru
          _
        // Predicated region
        $region49: #{tpu_custom_call.1} parent=43 // pred_check
          %p290 = pneg %p64
        $region50: #{tpu_custom_call.1} parent=43 // pred_check_branch
          %292 = sbr.rel (%p290) target = $region52
        $region51: #{tpu_custom_call.1} parent=43 // pred_region
          %p293 = scmp.lt.s32.totalorder %s18, 1
          %s294 = scalar_select %p293, %s18, 1
          %s295 = smul.addr %s294, 2
          %s296 = smul.addr %s295, 8
          %s297 = scalar_lea.vmem %s1, %s296
        $region52: #{tpu_custom_call.1} parent=43 // pred_fallthru
          _
      $region44: #{tpu_custom_call.1} parent=5 // pred_fallthru
        _
      %p298 = scmp.le.s32.totalorder 1, %s18
      %p299 = scmp.lt.s32.totalorder %s18, 3
      %p300 = pnand %p298, %p299
      %p301 = pneg %p300
      // Predicated region
      $region53: #{tpu_custom_call.1} parent=5 // pred_check
        _
      $region54: #{tpu_custom_call.1} parent=5 // pred_check_branch
        %303 = sbr.rel (%p300) target = $region56
      $region55: #{tpu_custom_call.1} parent=5 // pred_region
        %s304 = ssub.s32 %s18, 1
        %p305 = scmp.lt.s32.totalorder %s23, 1
        %s306 = scalar_select %p305, %s23, 1
        %s307 = smul.addr %s306, 8
        %s308 = scalar_lea.vmem %s0, %s307
        %p309 = pneg %p44
        %p310 = pneg %p41
        %p311 = scmp.lt.s32.totalorder %s23, 1
        %s312 = scalar_select %p311, %s23, 1
        %s313 = smul.addr %s312, 2
        %s314 = smul.addr %s313, 8
        %s315 = scalar_lea.vmem %s1, %s314
        %p316 = pneg %p70
        %p317 = pneg %p67
        %p318 = pneg %p91
        %p319 = pneg %p88
        %p320 = pneg %p112
        %p321 = pneg %p109
        %p322 = pneg %p133
        %p323 = pneg %p130
        %p324 = pneg %p154
        %p325 = pneg %p151
        %p326 = pneg %p175
        %p327 = pneg %p172
        %p328 = pneg %p196
        %p329 = pneg %p193
        %p330 = pneg %p217
        %p331 = pneg %p214
        %p332 = pneg %p243
        %p333 = pneg %p240
        %s334 = sand.u32 %s230, 1
        %s335 = scalar_lea.sflag [#allocation6], %s334
        %s336 = sand.u32 %s230, 1
        %s337 = smul.addr %s336, 16
        %s338 = scalar_lea.vmem [#allocation5], %s337
        %p339 = scmp.lt.s32.totalorder %s23, 1
        %s340 = scalar_select %p339, %s23, 1
        %s341 = smul.addr %s340, 8
        %s342 = scalar_lea.vmem %s0, %s341
        %p343 = scmp.lt.s32.totalorder %s23, 1
        %s344 = scalar_select %p343, %s23, 1
        %s345 = smul.addr %s344, 2
        %s346 = smul.addr %s345, 8
        %s347 = scalar_lea.vmem %s1, %s346
        %v348 = vld [vmem:[%s342] sm:$0xff]
        %v349 = vld [vmem:[%s2] sm:$0xff]
        %v350 = vld [vmem:[%s2 + $0x8] sm:$0xff]
        %vm351 = vcmask 64512
        %v353 = vsel %vm351, %v349, 0
        %v356 = vsel %vm351, %v350, 0
        %358 = vmatprep.subr.mxu0 0.0
        %359 = vmatpush1.msra.mxu0 0.0
        %360 = vmatprep.subr.mxu0 0.0
        %361 = vmatpush1.msra.mxu0 0.0
        %362 = vmatprep.subr.mxu0 0.0
        %363 = vmatpush1.msra.mxu0 0.0
        %364 = vmatprep.subr.mxu0 0.0
        %365 = vmatpush1.msra.mxu0 0.0
        %366 = vmatprep.subr.mxu0 0.0
        %367 = vmatpush1.msra.mxu0 0.0
        %368 = vmatprep.subr.mxu0 0.0
        %369 = vmatpush1.msra.mxu0 0.0
        %370 = vmatprep.subr.mxu0 0.0
        %371 = vmatpush1.msra.mxu0 0.0
        %372 = vmatprep.subr.mxu0 0.0
        %373 = vmatpush1.msra.mxu0 0.0
        %374 = vmatprep.subr.mxu0 0.0
        %375 = vmatpush1.msra.mxu0 0.0
        %376 = vmatprep.subr.mxu0 0.0
        %377 = vmatpush1.msra.mxu0 0.0
        %378 = vmatprep.subr.mxu0 0.0
        %379 = vmatpush1.msra.mxu0 0.0
        %380 = vmatprep.subr.mxu0 0.0
        %381 = vmatpush1.msra.mxu0 0.0
        %382 = vmatprep.subr.mxu0 0.0
        %383 = vmatpush1.msra.mxu0 0.0
        %384 = vmatprep.subr.mxu0 0.0
        %385 = vmatpush1.msra.mxu0 0.0
        %386 = vmatprep.subr.mxu0 0.0
        %387 = vmatpush1.msra.mxu0 0.0
        %388 = vmatprep.subr.mxu0 0.0
        %389 = vmatpush1.msra.mxu0 %v348
        %390 = vmatprep.subr.mxu0 0.0
        %391 = vmatpush2.msra.mxu0 0.0
        %392 = vmatprep.subr.mxu0 0.0
        %393 = vmatpush2.msra.mxu0 0.0
        %394 = vmatprep.subr.mxu0 0.0
        %395 = vmatpush2.msra.mxu0 0.0
        %396 = vmatprep.subr.mxu0 0.0
        %397 = vmatpush2.msra.mxu0 0.0
        %398 = vmatprep.subr.mxu0 0.0
        %399 = vmatpush2.msra.mxu0 0.0
        %400 = vmatprep.subr.mxu0 0.0
        %401 = vmatpush2.msra.mxu0 0.0
        %402 = vmatprep.subr.mxu0 0.0
        %403 = vmatpush2.msra.mxu0 0.0
        %404 = vmatprep.subr.mxu0 0.0
        %405 = vmatpush2.msra.mxu0 0.0
        %406 = vmatprep.subr.mxu0 0.0
        %407 = vmatpush2.msra.mxu0 0.0
        %408 = vmatprep.subr.mxu0 0.0
        %409 = vmatpush2.msra.mxu0 0.0
        %410 = vmatprep.subr.mxu0 0.0
        %411 = vmatpush2.msra.mxu0 0.0
        %412 = vmatprep.subr.mxu0 0.0
        %413 = vmatpush2.msra.mxu0 0.0
        %414 = vmatprep.subr.mxu0 0.0
        %415 = vmatpush2.msra.mxu0 0.0
        %416 = vmatprep.subr.mxu0 0.0
        %417 = vmatpush2.msra.mxu0 0.0
        %418 = vmatprep.subr.mxu0 0.0
        %419 = vmatpush2.msra.mxu0 0.0
        %420 = vmatprep.subr.mxu0 0.0
        %421 = vmatpush2.msra.mxu0 0.0
        %422 = vmatprep.mubr.f32.mxu0 0.0
        %423 = vmatmul.mubr.f32.gmra.mxu0 %v353
        %v424 = vpop.f32.mrf.mxu0
        %v425 = vadd.f32 0.0, %v424
        %v426 = vpop.f32.mrf.mxu0
        %427 = vmatprep.mubr.f32.mxu0 0.0
        %428 = vmatmul.mubr.f32.gmra.mxu0 %v356
        %v429 = vpop.f32.mrf.mxu0
        %v430 = vadd.f32 0.0, %v429
        %v431 = vpop.f32.mrf.mxu0
        %432 = vdwg.mxu0
        %v433 = vld [vmem:[%s3] sm:$0xff]
        %v434 = vld [vmem:[%s3 + $0x8] sm:$0xff]
        %v435 = vld [vmem:[%s3 + $0x10] sm:$0xff]
        %v436 = vld [vmem:[%s3 + $0x18] sm:$0xff]
        %vm437 = vcmask 261120
        %v439 = vsel %vm437, %v425, 0
        %v442 = vsel %vm437, %v430, 0
        %444 = vmatprep.subr.mxu0 0.0
        %445 = vmatpush1.msra.mxu0 0.0
        %446 = vmatprep.subr.mxu0 0.0
        %447 = vmatpush1.msra.mxu0 0.0
        %448 = vmatprep.subr.mxu0 0.0
        %449 = vmatpush1.msra.mxu0 0.0
        %450 = vmatprep.subr.mxu0 0.0
        %451 = vmatpush1.msra.mxu0 0.0
        %452 = vmatprep.subr.mxu0 0.0
        %453 = vmatpush1.msra.mxu0 0.0
        %454 = vmatprep.subr.mxu0 0.0
        %455 = vmatpush1.msra.mxu0 0.0
        %456 = vmatprep.subr.mxu0 0.0
        %457 = vmatpush1.msra.mxu0 0.0
        %458 = vmatprep.subr.mxu0 0.0
        %459 = vmatpush1.msra.mxu0 0.0
        %460 = vmatprep.subr.mxu0 0.0
        %461 = vmatpush1.msra.mxu0 0.0
        %462 = vmatprep.subr.mxu0 0.0
        %463 = vmatpush1.msra.mxu0 0.0
        %464 = vmatprep.subr.mxu0 0.0
        %465 = vmatpush1.msra.mxu0 0.0
        %466 = vmatprep.subr.mxu0 0.0
        %467 = vmatpush1.msra.mxu0 0.0
        %468 = vmatprep.subr.mxu0 0.0
        %469 = vmatpush1.msra.mxu0 %v436
        %470 = vmatprep.subr.mxu0 0.0
        %471 = vmatpush1.msra.mxu0 %v435
        %472 = vmatprep.subr.mxu0 0.0
        %473 = vmatpush1.msra.mxu0 %v434
        %474 = vmatprep.subr.mxu0 0.0
        %475 = vmatpush1.msra.mxu0 %v433
        %476 = vmatprep.subr.mxu0 0.0
        %477 = vmatpush2.msra.mxu0 0.0
        %478 = vmatprep.subr.mxu0 0.0
        %479 = vmatpush2.msra.mxu0 0.0
        %480 = vmatprep.subr.mxu0 0.0
        %481 = vmatpush2.msra.mxu0 0.0
        %482 = vmatprep.subr.mxu0 0.0
        %483 = vmatpush2.msra.mxu0 0.0
        %484 = vmatprep.subr.mxu0 0.0
        %485 = vmatpush2.msra.mxu0 0.0
        %486 = vmatprep.subr.mxu0 0.0
        %487 = vmatpush2.msra.mxu0 0.0
        %488 = vmatprep.subr.mxu0 0.0
        %489 = vmatpush2.msra.mxu0 0.0
        %490 = vmatprep.subr.mxu0 0.0
        %491 = vmatpush2.msra.mxu0 0.0
        %492 = vmatprep.subr.mxu0 0.0
        %493 = vmatpush2.msra.mxu0 0.0
        %494 = vmatprep.subr.mxu0 0.0
        %495 = vmatpush2.msra.mxu0 0.0
        %496 = vmatprep.subr.mxu0 0.0
        %497 = vmatpush2.msra.mxu0 0.0
        %498 = vmatprep.subr.mxu0 0.0
        %499 = vmatpush2.msra.mxu0 0.0
        %500 = vmatprep.subr.mxu0 0.0
        %501 = vmatpush2.msra.mxu0 0.0
        %502 = vmatprep.subr.mxu0 0.0
        %503 = vmatpush2.msra.mxu0 0.0
        %504 = vmatprep.subr.mxu0 0.0
        %505 = vmatpush2.msra.mxu0 0.0
        %506 = vmatprep.subr.mxu0 0.0
        %507 = vmatpush2.msra.mxu0 0.0
        %508 = vmatprep.mubr.f32.mxu0 0.0
        %509 = vmatmul.mubr.f32.gmra.mxu0 %v439
        %v510 = vpop.f32.mrf.mxu0
        %v511 = vadd.f32 0.0, %v510
        %v512 = vpop.f32.mrf.mxu0
        %513 = vmatprep.mubr.f32.mxu0 0.0
        %514 = vmatmul.mubr.f32.gmra.mxu0 %v442
        %v515 = vpop.f32.mrf.mxu0
        %v516 = vadd.f32 0.0, %v515
        %v517 = vpop.f32.mrf.mxu0
        %518 = vdwg.mxu0
        %vm519 = vcmask 654336
        %520 = vst.msk [vmem:[#allocation2] sm:$0xff] %vm519, 0.0
        %521 = vst.msk [vmem:[#allocation2 + $0x8] sm:$0xff] %vm519, 0.0
        %vm522 = vcmask 650240
        %523 = vst.msk [vmem:[#allocation2 + $0x10] sm:$0xf] %vm522, 0.0
        %526 = vrot.lane.b32.xlu0 %v511, 8
        %v527 = vpop.permute.xlu0 %526
        %528 = vrot.lane.b32.xlu0 %v516, 8
        %v529 = vpop.permute.xlu0 %528
        %vm532 = vcmask 588864
        %533 = vst.msk [vmem:[#allocation2 + $0x2] sm:$0xff] %vm532, %v527
        %534 = vst.msk [vmem:[#allocation2 + $0xa] sm:$0xff] %vm532, %v529
        %v535 = vld [vmem:[#allocation2] sm:$0xff]
        %v536 = vld [vmem:[#allocation2 + $0x8] sm:$0xff]
        %v537 = vld [vmem:[#allocation2 + $0x10] sm:$0x3]
        %v538 = vld [vmem:[%s4] sm:$0xff]
        %v539 = vld [vmem:[%s4 + $0x8] sm:$0xff]
        %v540 = vld [vmem:[%s4 + $0x10] sm:$0xff]
        %v541 = vld [vmem:[%s4 + $0x18] sm:$0xff]
        %v542 = vld [vmem:[%s4 + $0x20] sm:$0xff]
        %v543 = vld [vmem:[%s4 + $0x28] sm:$0xff]
        %v544 = vld [vmem:[%s4 + $0x30] sm:$0xff]
        %v545 = vld [vmem:[%s4 + $0x38] sm:$0xff]
        %v546 = vld [vmem:[%s4 + $0x40] sm:$0xff]
        %v547 = vld [vmem:[%s4 + $0x48] sm:$0xff]
        %v548 = vld [vmem:[#allocation2 + $0x1] sm:$0xff]
        %v549 = vld [vmem:[#allocation2 + $0x9] sm:$0xff]
        %v550 = vld [vmem:[#allocation2 + $0x11] sm:$0x3]
        %s551 = scalar_lea.vmem %s4, 80
        %v552 = vld [vmem:[%s551] sm:$0xff]
        %v553 = vld [vmem:[%s551 + $0x8] sm:$0xff]
        %v554 = vld [vmem:[%s551 + $0x10] sm:$0xff]
        %v555 = vld [vmem:[%s551 + $0x18] sm:$0xff]
        %v556 = vld [vmem:[%s551 + $0x20] sm:$0xff]
        %v557 = vld [vmem:[%s551 + $0x28] sm:$0xff]
        %v558 = vld [vmem:[%s551 + $0x30] sm:$0xff]
        %v559 = vld [vmem:[%s551 + $0x38] sm:$0xff]
        %v560 = vld [vmem:[%s551 + $0x40] sm:$0xff]
        %v561 = vld [vmem:[%s551 + $0x48] sm:$0xff]
        %v563 = vsel %vm519, %v548, 0
        %v566 = vsel %vm519, %v549, 0
        %v569 = vsel %vm519, %v550, 0
        %571 = vmatprep.subr.mxu0 0.0
        %572 = vmatpush1.msra.mxu0 0.0
        %573 = vmatprep.subr.mxu0 0.0
        %574 = vmatpush1.msra.mxu0 0.0
        %575 = vmatprep.subr.mxu0 0.0
        %576 = vmatpush1.msra.mxu0 0.0
        %577 = vmatprep.subr.mxu0 0.0
        %578 = vmatpush1.msra.mxu0 0.0
        %579 = vmatprep.subr.mxu0 0.0
        %580 = vmatpush1.msra.mxu0 0.0
        %581 = vmatprep.subr.mxu0 0.0
        %582 = vmatpush1.msra.mxu0 0.0
        %583 = vmatprep.subr.mxu0 0.0
        %584 = vmatpush1.msra.mxu0 %v561
        %585 = vmatprep.subr.mxu0 0.0
        %586 = vmatpush1.msra.mxu0 %v560
        %587 = vmatprep.subr.mxu0 0.0
        %588 = vmatpush1.msra.mxu0 %v559
        %589 = vmatprep.subr.mxu0 0.0
        %590 = vmatpush1.msra.mxu0 %v558
        %591 = vmatprep.subr.mxu0 0.0
        %592 = vmatpush1.msra.mxu0 %v557
        %593 = vmatprep.subr.mxu0 0.0
        %594 = vmatpush1.msra.mxu0 %v556
        %595 = vmatprep.subr.mxu0 0.0
        %596 = vmatpush1.msra.mxu0 %v555
        %597 = vmatprep.subr.mxu0 0.0
        %598 = vmatpush1.msra.mxu0 %v554
        %599 = vmatprep.subr.mxu0 0.0
        %600 = vmatpush1.msra.mxu0 %v553
        %601 = vmatprep.subr.mxu0 0.0
        %602 = vmatpush1.msra.mxu0 %v552
        %603 = vmatprep.subr.mxu0 0.0
        %604 = vmatpush2.msra.mxu0 0.0
        %605 = vmatprep.subr.mxu0 0.0
        %606 = vmatpush2.msra.mxu0 0.0
        %607 = vmatprep.subr.mxu0 0.0
        %608 = vmatpush2.msra.mxu0 0.0
        %609 = vmatprep.subr.mxu0 0.0
        %610 = vmatpush2.msra.mxu0 0.0
        %611 = vmatprep.subr.mxu0 0.0
        %612 = vmatpush2.msra.mxu0 0.0
        %613 = vmatprep.subr.mxu0 0.0
        %614 = vmatpush2.msra.mxu0 0.0
        %615 = vmatprep.subr.mxu0 0.0
        %616 = vmatpush2.msra.mxu0 0.0
        %617 = vmatprep.subr.mxu0 0.0
        %618 = vmatpush2.msra.mxu0 0.0
        %619 = vmatprep.subr.mxu0 0.0
        %620 = vmatpush2.msra.mxu0 0.0
        %621 = vmatprep.subr.mxu0 0.0
        %622 = vmatpush2.msra.mxu0 0.0
        %623 = vmatprep.subr.mxu0 0.0
        %624 = vmatpush2.msra.mxu0 0.0
        %625 = vmatprep.subr.mxu0 0.0
        %626 = vmatpush2.msra.mxu0 0.0
        %627 = vmatprep.subr.mxu0 0.0
        %628 = vmatpush2.msra.mxu0 0.0
        %629 = vmatprep.subr.mxu0 0.0
        %630 = vmatpush2.msra.mxu0 0.0
        %631 = vmatprep.subr.mxu0 0.0
        %632 = vmatpush2.msra.mxu0 0.0
        %633 = vmatprep.subr.mxu0 0.0
        %634 = vmatpush2.msra.mxu0 0.0
        %635 = vmatprep.mubr.f32.mxu0 0.0
        %636 = vmatmul.mubr.f32.gmra.mxu0 %v563
        %v637 = vpop.f32.mrf.mxu0
        %v638 = vadd.f32 0.0, %v637
        %v639 = vpop.f32.mrf.mxu0
        %640 = vmatprep.mubr.f32.mxu0 0.0
        %641 = vmatmul.mubr.f32.gmra.mxu0 %v566
        %v642 = vpop.f32.mrf.mxu0
        %v643 = vadd.f32 0.0, %v642
        %v644 = vpop.f32.mrf.mxu0
        %645 = vmatprep.mubr.f32.mxu0 0.0
        %646 = vmatmul.mubr.f32.gmra.mxu0 %v569
        %v647 = vpop.f32.mrf.mxu0
        %v648 = vadd.f32 0.0, %v647
        %v649 = vpop.f32.mrf.mxu0
        %650 = vdwg.mxu0
        %v652 = vsel %vm519, %v535, 0
        %v655 = vsel %vm519, %v536, 0
        %v658 = vsel %vm519, %v537, 0
        %660 = vmatprep.subr.mxu0 0.0
        %661 = vmatpush1.msra.mxu0 0.0
        %662 = vmatprep.subr.mxu0 0.0
        %663 = vmatpush1.msra.mxu0 0.0
        %664 = vmatprep.subr.mxu0 0.0
        %665 = vmatpush1.msra.mxu0 0.0
        %666 = vmatprep.subr.mxu0 0.0
        %667 = vmatpush1.msra.mxu0 0.0
        %668 = vmatprep.subr.mxu0 0.0
        %669 = vmatpush1.msra.mxu0 0.0
        %670 = vmatprep.subr.mxu0 0.0
        %671 = vmatpush1.msra.mxu0 0.0
        %672 = vmatprep.subr.mxu0 0.0
        %673 = vmatpush1.msra.mxu0 %v547
        %674 = vmatprep.subr.mxu0 0.0
        %675 = vmatpush1.msra.mxu0 %v546
        %676 = vmatprep.subr.mxu0 0.0
        %677 = vmatpush1.msra.mxu0 %v545
        %678 = vmatprep.subr.mxu0 0.0
        %679 = vmatpush1.msra.mxu0 %v544
        %680 = vmatprep.subr.mxu0 0.0
        %681 = vmatpush1.msra.mxu0 %v543
        %682 = vmatprep.subr.mxu0 0.0
        %683 = vmatpush1.msra.mxu0 %v542
        %684 = vmatprep.subr.mxu0 0.0
        %685 = vmatpush1.msra.mxu0 %v541
        %686 = vmatprep.subr.mxu0 0.0
        %687 = vmatpush1.msra.mxu0 %v540
        %688 = vmatprep.subr.mxu0 0.0
        %689 = vmatpush1.msra.mxu0 %v539
        %690 = vmatprep.subr.mxu0 0.0
        %691 = vmatpush1.msra.mxu0 %v538
        %692 = vmatprep.subr.mxu0 0.0
        %693 = vmatpush2.msra.mxu0 0.0
        %694 = vmatprep.subr.mxu0 0.0
        %695 = vmatpush2.msra.mxu0 0.0
        %696 = vmatprep.subr.mxu0 0.0
        %697 = vmatpush2.msra.mxu0 0.0
        %698 = vmatprep.subr.mxu0 0.0
        %699 = vmatpush2.msra.mxu0 0.0
        %700 = vmatprep.subr.mxu0 0.0
        %701 = vmatpush2.msra.mxu0 0.0
        %702 = vmatprep.subr.mxu0 0.0
        %703 = vmatpush2.msra.mxu0 0.0
        %704 = vmatprep.subr.mxu0 0.0
        %705 = vmatpush2.msra.mxu0 0.0
        %706 = vmatprep.subr.mxu0 0.0
        %707 = vmatpush2.msra.mxu0 0.0
        %708 = vmatprep.subr.mxu0 0.0
        %709 = vmatpush2.msra.mxu0 0.0
        %710 = vmatprep.subr.mxu0 0.0
        %711 = vmatpush2.msra.mxu0 0.0
        %712 = vmatprep.subr.mxu0 0.0
        %713 = vmatpush2.msra.mxu0 0.0
        %714 = vmatprep.subr.mxu0 0.0
        %715 = vmatpush2.msra.mxu0 0.0
        %716 = vmatprep.subr.mxu0 0.0
        %717 = vmatpush2.msra.mxu0 0.0
        %718 = vmatprep.subr.mxu0 0.0
        %719 = vmatpush2.msra.mxu0 0.0
        %720 = vmatprep.subr.mxu0 0.0
        %721 = vmatpush2.msra.mxu0 0.0
        %722 = vmatprep.subr.mxu0 0.0
        %723 = vmatpush2.msra.mxu0 0.0
        %724 = vmatprep.mubr.f32.mxu0 0.0
        %725 = vmatmul.mubr.f32.gmra.mxu0 %v652
        %v726 = vpop.f32.mrf.mxu0
        %v727 = vadd.f32 %v638, %v726
        %v728 = vpop.f32.mrf.mxu0
        %729 = vmatprep.mubr.f32.mxu0 0.0
        %730 = vmatmul.mubr.f32.gmra.mxu0 %v655
        %v731 = vpop.f32.mrf.mxu0
        %v732 = vadd.f32 %v643, %v731
        %v733 = vpop.f32.mrf.mxu0
        %734 = vmatprep.mubr.f32.mxu0 0.0
        %735 = vmatmul.mubr.f32.gmra.mxu0 %v658
        %v736 = vpop.f32.mrf.mxu0
        %v737 = vadd.f32 %v648, %v736
        %v738 = vpop.f32.mrf.mxu0
        %739 = vdwg.mxu0
        %v740 = vld [vmem:[#allocation2 + $0x2] sm:$0xff]
        %v741 = vld [vmem:[#allocation2 + $0xa] sm:$0xff]
        %v742 = vld [vmem:[#allocation2 + $0x12] sm:$0x3]
        %s743 = scalar_lea.vmem %s4, 160
        %v744 = vld [vmem:[%s743] sm:$0xff]
        %v745 = vld [vmem:[%s743 + $0x8] sm:$0xff]
        %v746 = vld [vmem:[%s743 + $0x10] sm:$0xff]
        %v747 = vld [vmem:[%s743 + $0x18] sm:$0xff]
        %v748 = vld [vmem:[%s743 + $0x20] sm:$0xff]
        %v749 = vld [vmem:[%s743 + $0x28] sm:$0xff]
        %v750 = vld [vmem:[%s743 + $0x30] sm:$0xff]
        %v751 = vld [vmem:[%s743 + $0x38] sm:$0xff]
        %v752 = vld [vmem:[%s743 + $0x40] sm:$0xff]
        %v753 = vld [vmem:[%s743 + $0x48] sm:$0xff]
        %v755 = vsel %vm519, %v740, 0
        %v758 = vsel %vm519, %v741, 0
        %v761 = vsel %vm519, %v742, 0
        %763 = vmatprep.subr.mxu0 0.0
        %764 = vmatpush1.msra.mxu0 0.0
        %765 = vmatprep.subr.mxu0 0.0
        %766 = vmatpush1.msra.mxu0 0.0
        %767 = vmatprep.subr.mxu0 0.0
        %768 = vmatpush1.msra.mxu0 0.0
        %769 = vmatprep.subr.mxu0 0.0
        %770 = vmatpush1.msra.mxu0 0.0
        %771 = vmatprep.subr.mxu0 0.0
        %772 = vmatpush1.msra.mxu0 0.0
        %773 = vmatprep.subr.mxu0 0.0
        %774 = vmatpush1.msra.mxu0 0.0
        %775 = vmatprep.subr.mxu0 0.0
        %776 = vmatpush1.msra.mxu0 %v753
        %777 = vmatprep.subr.mxu0 0.0
        %778 = vmatpush1.msra.mxu0 %v752
        %779 = vmatprep.subr.mxu0 0.0
        %780 = vmatpush1.msra.mxu0 %v751
        %781 = vmatprep.subr.mxu0 0.0
        %782 = vmatpush1.msra.mxu0 %v750
        %783 = vmatprep.subr.mxu0 0.0
        %784 = vmatpush1.msra.mxu0 %v749
        %785 = vmatprep.subr.mxu0 0.0
        %786 = vmatpush1.msra.mxu0 %v748
        %787 = vmatprep.subr.mxu0 0.0
        %788 = vmatpush1.msra.mxu0 %v747
        %789 = vmatprep.subr.mxu0 0.0
        %790 = vmatpush1.msra.mxu0 %v746
        %791 = vmatprep.subr.mxu0 0.0
        %792 = vmatpush1.msra.mxu0 %v745
        %793 = vmatprep.subr.mxu0 0.0
        %794 = vmatpush1.msra.mxu0 %v744
        %795 = vmatprep.subr.mxu0 0.0
        %796 = vmatpush2.msra.mxu0 0.0
        %797 = vmatprep.subr.mxu0 0.0
        %798 = vmatpush2.msra.mxu0 0.0
        %799 = vmatprep.subr.mxu0 0.0
        %800 = vmatpush2.msra.mxu0 0.0
        %801 = vmatprep.subr.mxu0 0.0
        %802 = vmatpush2.msra.mxu0 0.0
        %803 = vmatprep.subr.mxu0 0.0
        %804 = vmatpush2.msra.mxu0 0.0
        %805 = vmatprep.subr.mxu0 0.0
        %806 = vmatpush2.msra.mxu0 0.0
        %807 = vmatprep.subr.mxu0 0.0
        %808 = vmatpush2.msra.mxu0 0.0
        %809 = vmatprep.subr.mxu0 0.0
        %810 = vmatpush2.msra.mxu0 0.0
        %811 = vmatprep.subr.mxu0 0.0
        %812 = vmatpush2.msra.mxu0 0.0
        %813 = vmatprep.subr.mxu0 0.0
        %814 = vmatpush2.msra.mxu0 0.0
        %815 = vmatprep.subr.mxu0 0.0
        %816 = vmatpush2.msra.mxu0 0.0
        %817 = vmatprep.subr.mxu0 0.0
        %818 = vmatpush2.msra.mxu0 0.0
        %819 = vmatprep.subr.mxu0 0.0
        %820 = vmatpush2.msra.mxu0 0.0
        %821 = vmatprep.subr.mxu0 0.0
        %822 = vmatpush2.msra.mxu0 0.0
        %823 = vmatprep.subr.mxu0 0.0
        %824 = vmatpush2.msra.mxu0 0.0
        %825 = vmatprep.subr.mxu0 0.0
        %826 = vmatpush2.msra.mxu0 0.0
        %827 = vmatprep.mubr.f32.mxu0 0.0
        %828 = vmatmul.mubr.f32.gmra.mxu0 %v755
        %v829 = vpop.f32.mrf.mxu0
        %v830 = vadd.f32 0.0, %v829
        %v831 = vpop.f32.mrf.mxu0
        %832 = vmatprep.mubr.f32.mxu0 0.0
        %833 = vmatmul.mubr.f32.gmra.mxu0 %v758
        %v834 = vpop.f32.mrf.mxu0
        %v835 = vadd.f32 0.0, %v834
        %v836 = vpop.f32.mrf.mxu0
        %837 = vmatprep.mubr.f32.mxu0 0.0
        %838 = vmatmul.mubr.f32.gmra.mxu0 %v761
        %v839 = vpop.f32.mrf.mxu0
        %v840 = vadd.f32 0.0, %v839
        %v841 = vpop.f32.mrf.mxu0
        %842 = vdwg.mxu0
        %v843 = vadd.f32 %v727, %v830
        %v844 = vadd.f32 %v732, %v835
        %v845 = vadd.f32 %v737, %v840
        %v846 = vld [vmem:[%s5] sm:$0x1]
        %v848 = vlaneseq
        %v849 = vshrl.u32 %v848, 7
        %v850 = vsub.s32 0, %v849
        %v851 = vrot.slane %v846, %v850
        %v853 = vadd.f32 %v843, %v851
        %v854 = vadd.f32 %v844, %v851
        %v855 = vadd.f32 %v845, %v851
        %v856 = vmax.f32 %v853, 0.0
        %v857 = vmax.f32 %v854, 0.0
        %v858 = vmax.f32 %v855, 0.0
        %vm859 = vcmask 588800
        %860 = vst.msk [vmem:[#allocation3] sm:$0xff] %vm859, 0.0
        %861 = vst.msk [vmem:[#allocation3 + $0x8] sm:$0xff] %vm859, 0.0
        %vm862 = vcmask 582656
        %863 = vst.msk [vmem:[#allocation3 + $0x10] sm:$0x3] %vm862, 0.0
        %vm864 = vcmask 556065
        %865 = vst.msk [vmem:[#allocation3] sm:$0xfe] %vm864, %v856
        %vm866 = vcmask 556064
        %867 = vst.msk [vmem:[#allocation3 + $0x8] sm:$0xff] %vm866, %v857
        %vm868 = vcmask 548896
        %869 = vst.msk [vmem:[#allocation3 + $0x10] sm:$0x1] %vm868, %v858
        %870 = vst.msk [vmem:[#allocation4] sm:$0xff] %vm859, 0.0
        %871 = vst.msk [vmem:[#allocation4 + $0x8] sm:$0xff] %vm859, 0.0
        %872 = vst.msk [vmem:[#allocation4 + $0x10] sm:$0x3] %vm862, 0.0
        %v873 = vld [vmem:[%s347] sm:$0xff]
        %v874 = vld [vmem:[%s347 + $0x8] sm:$0xff]
        %877 = vrot.lane.b32.xlu0 %v873, 4
        %v878 = vpop.permute.xlu0 %877
        %879 = vrot.lane.b32.xlu0 %v874, 4
        %v880 = vpop.permute.xlu0 %879
        %883 = vst.msk [vmem:[#allocation4 + $0x1] sm:$0xff] %vm866, %v878
        %884 = vst.msk [vmem:[#allocation4 + $0x9] sm:$0xff] %vm866, %v880
        %v885 = vld [vmem:[#allocation3] sm:$0xff]
        %v886 = vld [vmem:[#allocation3 + $0x8] sm:$0xff]
        %v887 = vld [vmem:[%s6] sm:$0xff]
        %v888 = vld [vmem:[%s6 + $0x8] sm:$0xff]
        %v889 = vld [vmem:[%s6 + $0x10] sm:$0xff]
        %v890 = vld [vmem:[%s6 + $0x18] sm:$0xff]
        %v891 = vld [vmem:[%s6 + $0x20] sm:$0xff]
        %v892 = vld [vmem:[%s6 + $0x28] sm:$0xff]
        %v893 = vld [vmem:[%s6 + $0x30] sm:$0xff]
        %v894 = vld [vmem:[%s6 + $0x38] sm:$0xff]
        %v895 = vld [vmem:[%s6 + $0x40] sm:$0xff]
        %v896 = vld [vmem:[#allocation4] sm:$0xff]
        %v897 = vld [vmem:[#allocation4 + $0x8] sm:$0xff]
        %v898 = vld [vmem:[%s7] sm:$0xff]
        %v899 = vld [vmem:[%s7 + $0x8] sm:$0xff]
        %v900 = vld [vmem:[%s7 + $0x10] sm:$0xff]
        %v901 = vld [vmem:[%s7 + $0x18] sm:$0xff]
        %v902 = vld [vmem:[%s7 + $0x20] sm:$0xff]
        %v903 = vld [vmem:[%s7 + $0x28] sm:$0xff]
        %v904 = vld [vmem:[%s7 + $0x30] sm:$0xff]
        %v905 = vld [vmem:[%s7 + $0x38] sm:$0xff]
        %v906 = vld [vmem:[%s7 + $0x40] sm:$0xff]
        %v908 = vsel %vm859, %v896, 0
        %v911 = vsel %vm859, %v897, 0
        %913 = vmatprep.subr.mxu0 0.0
        %914 = vmatpush1.msra.mxu0 0.0
        %915 = vmatprep.subr.mxu0 0.0
        %916 = vmatpush1.msra.mxu0 0.0
        %917 = vmatprep.subr.mxu0 0.0
        %918 = vmatpush1.msra.mxu0 0.0
        %919 = vmatprep.subr.mxu0 0.0
        %920 = vmatpush1.msra.mxu0 0.0
        %921 = vmatprep.subr.mxu0 0.0
        %922 = vmatpush1.msra.mxu0 0.0
        %923 = vmatprep.subr.mxu0 0.0
        %924 = vmatpush1.msra.mxu0 0.0
        %925 = vmatprep.subr.mxu0 0.0
        %926 = vmatpush1.msra.mxu0 0.0
        %927 = vmatprep.subr.mxu0 0.0
        %928 = vmatpush1.msra.mxu0 %v906
        %929 = vmatprep.subr.mxu0 0.0
        %930 = vmatpush1.msra.mxu0 %v905
        %931 = vmatprep.subr.mxu0 0.0
        %932 = vmatpush1.msra.mxu0 %v904
        %933 = vmatprep.subr.mxu0 0.0
        %934 = vmatpush1.msra.mxu0 %v903
        %935 = vmatprep.subr.mxu0 0.0
        %936 = vmatpush1.msra.mxu0 %v902
        %937 = vmatprep.subr.mxu0 0.0
        %938 = vmatpush1.msra.mxu0 %v901
        %939 = vmatprep.subr.mxu0 0.0
        %940 = vmatpush1.msra.mxu0 %v900
        %941 = vmatprep.subr.mxu0 0.0
        %942 = vmatpush1.msra.mxu0 %v899
        %943 = vmatprep.subr.mxu0 0.0
        %944 = vmatpush1.msra.mxu0 %v898
        %945 = vmatprep.subr.mxu0 0.0
        %946 = vmatpush2.msra.mxu0 0.0
        %947 = vmatprep.subr.mxu0 0.0
        %948 = vmatpush2.msra.mxu0 0.0
        %949 = vmatprep.subr.mxu0 0.0
        %950 = vmatpush2.msra.mxu0 0.0
        %951 = vmatprep.subr.mxu0 0.0
        %952 = vmatpush2.msra.mxu0 0.0
        %953 = vmatprep.subr.mxu0 0.0
        %954 = vmatpush2.msra.mxu0 0.0
        %955 = vmatprep.subr.mxu0 0.0
        %956 = vmatpush2.msra.mxu0 0.0
        %957 = vmatprep.subr.mxu0 0.0
        %958 = vmatpush2.msra.mxu0 0.0
        %959 = vmatprep.subr.mxu0 0.0
        %960 = vmatpush2.msra.mxu0 0.0
        %961 = vmatprep.subr.mxu0 0.0
        %962 = vmatpush2.msra.mxu0 0.0
        %963 = vmatprep.subr.mxu0 0.0
        %964 = vmatpush2.msra.mxu0 0.0
        %965 = vmatprep.subr.mxu0 0.0
        %966 = vmatpush2.msra.mxu0 0.0
        %967 = vmatprep.subr.mxu0 0.0
        %968 = vmatpush2.msra.mxu0 0.0
        %969 = vmatprep.subr.mxu0 0.0
        %970 = vmatpush2.msra.mxu0 0.0
        %971 = vmatprep.subr.mxu0 0.0
        %972 = vmatpush2.msra.mxu0 0.0
        %973 = vmatprep.subr.mxu0 0.0
        %974 = vmatpush2.msra.mxu0 0.0
        %975 = vmatprep.subr.mxu0 0.0
        %976 = vmatpush2.msra.mxu0 0.0
        %977 = vmatprep.mubr.f32.mxu0 0.0
        %978 = vmatmul.mubr.f32.gmra.mxu0 %v908
        %v979 = vpop.f32.mrf.mxu0
        %v980 = vadd.f32 0.0, %v979
        %v981 = vpop.f32.mrf.mxu0
        %982 = vmatprep.mubr.f32.mxu0 0.0
        %983 = vmatmul.mubr.f32.gmra.mxu0 %v911
        %v984 = vpop.f32.mrf.mxu0
        %v985 = vadd.f32 0.0, %v984
        %v986 = vpop.f32.mrf.mxu0
        %987 = vdwg.mxu0
        %v989 = vsel %vm859, %v885, 0
        %v992 = vsel %vm859, %v886, 0
        %994 = vmatprep.subr.mxu0 0.0
        %995 = vmatpush1.msra.mxu0 0.0
        %996 = vmatprep.subr.mxu0 0.0
        %997 = vmatpush1.msra.mxu0 0.0
        %998 = vmatprep.subr.mxu0 0.0
        %999 = vmatpush1.msra.mxu0 0.0
        %1000 = vmatprep.subr.mxu0 0.0
        %1001 = vmatpush1.msra.mxu0 0.0
        %1002 = vmatprep.subr.mxu0 0.0
        %1003 = vmatpush1.msra.mxu0 0.0
        %1004 = vmatprep.subr.mxu0 0.0
        %1005 = vmatpush1.msra.mxu0 0.0
        %1006 = vmatprep.subr.mxu0 0.0
        %1007 = vmatpush1.msra.mxu0 0.0
        %1008 = vmatprep.subr.mxu0 0.0
        %1009 = vmatpush1.msra.mxu0 %v895
        %1010 = vmatprep.subr.mxu0 0.0
        %1011 = vmatpush1.msra.mxu0 %v894
        %1012 = vmatprep.subr.mxu0 0.0
        %1013 = vmatpush1.msra.mxu0 %v893
        %1014 = vmatprep.subr.mxu0 0.0
        %1015 = vmatpush1.msra.mxu0 %v892
        %1016 = vmatprep.subr.mxu0 0.0
        %1017 = vmatpush1.msra.mxu0 %v891
        %1018 = vmatprep.subr.mxu0 0.0
        %1019 = vmatpush1.msra.mxu0 %v890
        %1020 = vmatprep.subr.mxu0 0.0
        %1021 = vmatpush1.msra.mxu0 %v889
        %1022 = vmatprep.subr.mxu0 0.0
        %1023 = vmatpush1.msra.mxu0 %v888
        %1024 = vmatprep.subr.mxu0 0.0
        %1025 = vmatpush1.msra.mxu0 %v887
        %1026 = vmatprep.subr.mxu0 0.0
        %1027 = vmatpush2.msra.mxu0 0.0
        %1028 = vmatprep.subr.mxu0 0.0
        %1029 = vmatpush2.msra.mxu0 0.0
        %1030 = vmatprep.subr.mxu0 0.0
        %1031 = vmatpush2.msra.mxu0 0.0
        %1032 = vmatprep.subr.mxu0 0.0
        %1033 = vmatpush2.msra.mxu0 0.0
        %1034 = vmatprep.subr.mxu0 0.0
        %1035 = vmatpush2.msra.mxu0 0.0
        %1036 = vmatprep.subr.mxu0 0.0
        %1037 = vmatpush2.msra.mxu0 0.0
        %1038 = vmatprep.subr.mxu0 0.0
        %1039 = vmatpush2.msra.mxu0 0.0
        %1040 = vmatprep.subr.mxu0 0.0
        %1041 = vmatpush2.msra.mxu0 0.0
        %1042 = vmatprep.subr.mxu0 0.0
        %1043 = vmatpush2.msra.mxu0 0.0
        %1044 = vmatprep.subr.mxu0 0.0
        %1045 = vmatpush2.msra.mxu0 0.0
        %1046 = vmatprep.subr.mxu0 0.0
        %1047 = vmatpush2.msra.mxu0 0.0
        %1048 = vmatprep.subr.mxu0 0.0
        %1049 = vmatpush2.msra.mxu0 0.0
        %1050 = vmatprep.subr.mxu0 0.0
        %1051 = vmatpush2.msra.mxu0 0.0
        %1052 = vmatprep.subr.mxu0 0.0
        %1053 = vmatpush2.msra.mxu0 0.0
        %1054 = vmatprep.subr.mxu0 0.0
        %1055 = vmatpush2.msra.mxu0 0.0
        %1056 = vmatprep.subr.mxu0 0.0
        %1057 = vmatpush2.msra.mxu0 0.0
        %1058 = vmatprep.mubr.f32.mxu0 0.0
        %1059 = vmatmul.mubr.f32.gmra.mxu0 %v989
        %v1060 = vpop.f32.mrf.mxu0
        %v1061 = vadd.f32 %v980, %v1060
        %v1062 = vpop.f32.mrf.mxu0
        %1063 = vmatprep.mubr.f32.mxu0 0.0
        %1064 = vmatmul.mubr.f32.gmra.mxu0 %v992
        %v1065 = vpop.f32.mrf.mxu0
        %v1066 = vadd.f32 %v985, %v1065
        %v1067 = vpop.f32.mrf.mxu0
        %1068 = vdwg.mxu0
        %v1069 = vld [vmem:[#allocation3 + $0x1] sm:$0xff]
        %v1070 = vld [vmem:[#allocation3 + $0x9] sm:$0xff]
        %s1071 = scalar_lea.vmem %s6, 72
        %v1072 = vld [vmem:[%s1071] sm:$0xff]
        %v1073 = vld [vmem:[%s1071 + $0x8] sm:$0xff]
        %v1074 = vld [vmem:[%s1071 + $0x10] sm:$0xff]
        %v1075 = vld [vmem:[%s1071 + $0x18] sm:$0xff]
        %v1076 = vld [vmem:[%s1071 + $0x20] sm:$0xff]
        %v1077 = vld [vmem:[%s1071 + $0x28] sm:$0xff]
        %v1078 = vld [vmem:[%s1071 + $0x30] sm:$0xff]
        %v1079 = vld [vmem:[%s1071 + $0x38] sm:$0xff]
        %v1080 = vld [vmem:[%s1071 + $0x40] sm:$0xff]
        %v1082 = vsel %vm859, %v1069, 0
        %v1085 = vsel %vm859, %v1070, 0
        %1087 = vmatprep.subr.mxu0 0.0
        %1088 = vmatpush1.msra.mxu0 0.0
        %1089 = vmatprep.subr.mxu0 0.0
        %1090 = vmatpush1.msra.mxu0 0.0
        %1091 = vmatprep.subr.mxu0 0.0
        %1092 = vmatpush1.msra.mxu0 0.0
        %1093 = vmatprep.subr.mxu0 0.0
        %1094 = vmatpush1.msra.mxu0 0.0
        %1095 = vmatprep.subr.mxu0 0.0
        %1096 = vmatpush1.msra.mxu0 0.0
        %1097 = vmatprep.subr.mxu0 0.0
        %1098 = vmatpush1.msra.mxu0 0.0
        %1099 = vmatprep.subr.mxu0 0.0
        %1100 = vmatpush1.msra.mxu0 0.0
        %1101 = vmatprep.subr.mxu0 0.0
        %1102 = vmatpush1.msra.mxu0 %v1080
        %1103 = vmatprep.subr.mxu0 0.0
        %1104 = vmatpush1.msra.mxu0 %v1079
        %1105 = vmatprep.subr.mxu0 0.0
        %1106 = vmatpush1.msra.mxu0 %v1078
        %1107 = vmatprep.subr.mxu0 0.0
        %1108 = vmatpush1.msra.mxu0 %v1077
        %1109 = vmatprep.subr.mxu0 0.0
        %1110 = vmatpush1.msra.mxu0 %v1076
        %1111 = vmatprep.subr.mxu0 0.0
        %1112 = vmatpush1.msra.mxu0 %v1075
        %1113 = vmatprep.subr.mxu0 0.0
        %1114 = vmatpush1.msra.mxu0 %v1074
        %1115 = vmatprep.subr.mxu0 0.0
        %1116 = vmatpush1.msra.mxu0 %v1073
        %1117 = vmatprep.subr.mxu0 0.0
        %1118 = vmatpush1.msra.mxu0 %v1072
        %1119 = vmatprep.subr.mxu0 0.0
        %1120 = vmatpush2.msra.mxu0 0.0
        %1121 = vmatprep.subr.mxu0 0.0
        %1122 = vmatpush2.msra.mxu0 0.0
        %1123 = vmatprep.subr.mxu0 0.0
        %1124 = vmatpush2.msra.mxu0 0.0
        %1125 = vmatprep.subr.mxu0 0.0
        %1126 = vmatpush2.msra.mxu0 0.0
        %1127 = vmatprep.subr.mxu0 0.0
        %1128 = vmatpush2.msra.mxu0 0.0
        %1129 = vmatprep.subr.mxu0 0.0
        %1130 = vmatpush2.msra.mxu0 0.0
        %1131 = vmatprep.subr.mxu0 0.0
        %1132 = vmatpush2.msra.mxu0 0.0
        %1133 = vmatprep.subr.mxu0 0.0
        %1134 = vmatpush2.msra.mxu0 0.0
        %1135 = vmatprep.subr.mxu0 0.0
        %1136 = vmatpush2.msra.mxu0 0.0
        %1137 = vmatprep.subr.mxu0 0.0
        %1138 = vmatpush2.msra.mxu0 0.0
        %1139 = vmatprep.subr.mxu0 0.0
        %1140 = vmatpush2.msra.mxu0 0.0
        %1141 = vmatprep.subr.mxu0 0.0
        %1142 = vmatpush2.msra.mxu0 0.0
        %1143 = vmatprep.subr.mxu0 0.0
        %1144 = vmatpush2.msra.mxu0 0.0
        %1145 = vmatprep.subr.mxu0 0.0
        %1146 = vmatpush2.msra.mxu0 0.0
        %1147 = vmatprep.subr.mxu0 0.0
        %1148 = vmatpush2.msra.mxu0 0.0
        %1149 = vmatprep.subr.mxu0 0.0
        %1150 = vmatpush2.msra.mxu0 0.0
        %1151 = vmatprep.mubr.f32.mxu0 0.0
        %1152 = vmatmul.mubr.f32.gmra.mxu0 %v1082
        %v1153 = vpop.f32.mrf.mxu0
        %v1154 = vadd.f32 0.0, %v1153
        %v1155 = vpop.f32.mrf.mxu0
        %1156 = vmatprep.mubr.f32.mxu0 0.0
        %1157 = vmatmul.mubr.f32.gmra.mxu0 %v1085
        %v1158 = vpop.f32.mrf.mxu0
        %v1159 = vadd.f32 0.0, %v1158
        %v1160 = vpop.f32.mrf.mxu0
        %1161 = vdwg.mxu0
        %v1162 = vadd.f32 %v1061, %v1154
        %v1163 = vadd.f32 %v1066, %v1159
        %v1164 = vld [vmem:[#allocation4 + $0x1] sm:$0xff]
        %v1165 = vld [vmem:[#allocation4 + $0x9] sm:$0xff]
        %s1166 = scalar_lea.vmem %s7, 72
        %v1167 = vld [vmem:[%s1166] sm:$0xff]
        %v1168 = vld [vmem:[%s1166 + $0x8] sm:$0xff]
        %v1169 = vld [vmem:[%s1166 + $0x10] sm:$0xff]
        %v1170 = vld [vmem:[%s1166 + $0x18] sm:$0xff]
        %v1171 = vld [vmem:[%s1166 + $0x20] sm:$0xff]
        %v1172 = vld [vmem:[%s1166 + $0x28] sm:$0xff]
        %v1173 = vld [vmem:[%s1166 + $0x30] sm:$0xff]
        %v1174 = vld [vmem:[%s1166 + $0x38] sm:$0xff]
        %v1175 = vld [vmem:[%s1166 + $0x40] sm:$0xff]
        %v1177 = vsel %vm859, %v1164, 0
        %v1180 = vsel %vm859, %v1165, 0
        %1182 = vmatprep.subr.mxu0 0.0
        %1183 = vmatpush1.msra.mxu0 0.0
        %1184 = vmatprep.subr.mxu0 0.0
        %1185 = vmatpush1.msra.mxu0 0.0
        %1186 = vmatprep.subr.mxu0 0.0
        %1187 = vmatpush1.msra.mxu0 0.0
        %1188 = vmatprep.subr.mxu0 0.0
        %1189 = vmatpush1.msra.mxu0 0.0
        %1190 = vmatprep.subr.mxu0 0.0
        %1191 = vmatpush1.msra.mxu0 0.0
        %1192 = vmatprep.subr.mxu0 0.0
        %1193 = vmatpush1.msra.mxu0 0.0
        %1194 = vmatprep.subr.mxu0 0.0
        %1195 = vmatpush1.msra.mxu0 0.0
        %1196 = vmatprep.subr.mxu0 0.0
        %1197 = vmatpush1.msra.mxu0 %v1175
        %1198 = vmatprep.subr.mxu0 0.0
        %1199 = vmatpush1.msra.mxu0 %v1174
        %1200 = vmatprep.subr.mxu0 0.0
        %1201 = vmatpush1.msra.mxu0 %v1173
        %1202 = vmatprep.subr.mxu0 0.0
        %1203 = vmatpush1.msra.mxu0 %v1172
        %1204 = vmatprep.subr.mxu0 0.0
        %1205 = vmatpush1.msra.mxu0 %v1171
        %1206 = vmatprep.subr.mxu0 0.0
        %1207 = vmatpush1.msra.mxu0 %v1170
        %1208 = vmatprep.subr.mxu0 0.0
        %1209 = vmatpush1.msra.mxu0 %v1169
        %1210 = vmatprep.subr.mxu0 0.0
        %1211 = vmatpush1.msra.mxu0 %v1168
        %1212 = vmatprep.subr.mxu0 0.0
        %1213 = vmatpush1.msra.mxu0 %v1167
        %1214 = vmatprep.subr.mxu0 0.0
        %1215 = vmatpush2.msra.mxu0 0.0
        %1216 = vmatprep.subr.mxu0 0.0
        %1217 = vmatpush2.msra.mxu0 0.0
        %1218 = vmatprep.subr.mxu0 0.0
        %1219 = vmatpush2.msra.mxu0 0.0
        %1220 = vmatprep.subr.mxu0 0.0
        %1221 = vmatpush2.msra.mxu0 0.0
        %1222 = vmatprep.subr.mxu0 0.0
        %1223 = vmatpush2.msra.mxu0 0.0
        %1224 = vmatprep.subr.mxu0 0.0
        %1225 = vmatpush2.msra.mxu0 0.0
        %1226 = vmatprep.subr.mxu0 0.0
        %1227 = vmatpush2.msra.mxu0 0.0
        %1228 = vmatprep.subr.mxu0 0.0
        %1229 = vmatpush2.msra.mxu0 0.0
        %1230 = vmatprep.subr.mxu0 0.0
        %1231 = vmatpush2.msra.mxu0 0.0
        %1232 = vmatprep.subr.mxu0 0.0
        %1233 = vmatpush2.msra.mxu0 0.0
        %1234 = vmatprep.subr.mxu0 0.0
        %1235 = vmatpush2.msra.mxu0 0.0
        %1236 = vmatprep.subr.mxu0 0.0
        %1237 = vmatpush2.msra.mxu0 0.0
        %1238 = vmatprep.subr.mxu0 0.0
        %1239 = vmatpush2.msra.mxu0 0.0
        %1240 = vmatprep.subr.mxu0 0.0
        %1241 = vmatpush2.msra.mxu0 0.0
        %1242 = vmatprep.subr.mxu0 0.0
        %1243 = vmatpush2.msra.mxu0 0.0
        %1244 = vmatprep.subr.mxu0 0.0
        %1245 = vmatpush2.msra.mxu0 0.0
        %1246 = vmatprep.mubr.f32.mxu0 0.0
        %1247 = vmatmul.mubr.f32.gmra.mxu0 %v1177
        %v1248 = vpop.f32.mrf.mxu0
        %v1249 = vadd.f32 0.0, %v1248
        %v1250 = vpop.f32.mrf.mxu0
        %1251 = vmatprep.mubr.f32.mxu0 0.0
        %1252 = vmatmul.mubr.f32.gmra.mxu0 %v1180
        %v1253 = vpop.f32.mrf.mxu0
        %v1254 = vadd.f32 0.0, %v1253
        %v1255 = vpop.f32.mrf.mxu0
        %1256 = vdwg.mxu0
        %v1257 = vadd.f32 %v1162, %v1249
        %v1258 = vadd.f32 %v1163, %v1254
        %v1259 = vld [vmem:[#allocation3 + $0x2] sm:$0xff]
        %v1260 = vld [vmem:[#allocation3 + $0xa] sm:$0xff]
        %s1261 = scalar_lea.vmem %s6, 144
        %v1262 = vld [vmem:[%s1261] sm:$0xff]
        %v1263 = vld [vmem:[%s1261 + $0x8] sm:$0xff]
        %v1264 = vld [vmem:[%s1261 + $0x10] sm:$0xff]
        %v1265 = vld [vmem:[%s1261 + $0x18] sm:$0xff]
        %v1266 = vld [vmem:[%s1261 + $0x20] sm:$0xff]
        %v1267 = vld [vmem:[%s1261 + $0x28] sm:$0xff]
        %v1268 = vld [vmem:[%s1261 + $0x30] sm:$0xff]
        %v1269 = vld [vmem:[%s1261 + $0x38] sm:$0xff]
        %v1270 = vld [vmem:[%s1261 + $0x40] sm:$0xff]
        %v1272 = vsel %vm859, %v1259, 0
        %v1275 = vsel %vm859, %v1260, 0
        %1277 = vmatprep.subr.mxu0 0.0
        %1278 = vmatpush1.msra.mxu0 0.0
        %1279 = vmatprep.subr.mxu0 0.0
        %1280 = vmatpush1.msra.mxu0 0.0
        %1281 = vmatprep.subr.mxu0 0.0
        %1282 = vmatpush1.msra.mxu0 0.0
        %1283 = vmatprep.subr.mxu0 0.0
        %1284 = vmatpush1.msra.mxu0 0.0
        %1285 = vmatprep.subr.mxu0 0.0
        %1286 = vmatpush1.msra.mxu0 0.0
        %1287 = vmatprep.subr.mxu0 0.0
        %1288 = vmatpush1.msra.mxu0 0.0
        %1289 = vmatprep.subr.mxu0 0.0
        %1290 = vmatpush1.msra.mxu0 0.0
        %1291 = vmatprep.subr.mxu0 0.0
        %1292 = vmatpush1.msra.mxu0 %v1270
        %1293 = vmatprep.subr.mxu0 0.0
        %1294 = vmatpush1.msra.mxu0 %v1269
        %1295 = vmatprep.subr.mxu0 0.0
        %1296 = vmatpush1.msra.mxu0 %v1268
        %1297 = vmatprep.subr.mxu0 0.0
        %1298 = vmatpush1.msra.mxu0 %v1267
        %1299 = vmatprep.subr.mxu0 0.0
        %1300 = vmatpush1.msra.mxu0 %v1266
        %1301 = vmatprep.subr.mxu0 0.0
        %1302 = vmatpush1.msra.mxu0 %v1265
        %1303 = vmatprep.subr.mxu0 0.0
        %1304 = vmatpush1.msra.mxu0 %v1264
        %1305 = vmatprep.subr.mxu0 0.0
        %1306 = vmatpush1.msra.mxu0 %v1263
        %1307 = vmatprep.subr.mxu0 0.0
        %1308 = vmatpush1.msra.mxu0 %v1262
        %1309 = vmatprep.subr.mxu0 0.0
        %1310 = vmatpush2.msra.mxu0 0.0
        %1311 = vmatprep.subr.mxu0 0.0
        %1312 = vmatpush2.msra.mxu0 0.0
        %1313 = vmatprep.subr.mxu0 0.0
        %1314 = vmatpush2.msra.mxu0 0.0
        %1315 = vmatprep.subr.mxu0 0.0
        %1316 = vmatpush2.msra.mxu0 0.0
        %1317 = vmatprep.subr.mxu0 0.0
        %1318 = vmatpush2.msra.mxu0 0.0
        %1319 = vmatprep.subr.mxu0 0.0
        %1320 = vmatpush2.msra.mxu0 0.0
        %1321 = vmatprep.subr.mxu0 0.0
        %1322 = vmatpush2.msra.mxu0 0.0
        %1323 = vmatprep.subr.mxu0 0.0
        %1324 = vmatpush2.msra.mxu0 0.0
        %1325 = vmatprep.subr.mxu0 0.0
        %1326 = vmatpush2.msra.mxu0 0.0
        %1327 = vmatprep.subr.mxu0 0.0
        %1328 = vmatpush2.msra.mxu0 0.0
        %1329 = vmatprep.subr.mxu0 0.0
        %1330 = vmatpush2.msra.mxu0 0.0
        %1331 = vmatprep.subr.mxu0 0.0
        %1332 = vmatpush2.msra.mxu0 0.0
        %1333 = vmatprep.subr.mxu0 0.0
        %1334 = vmatpush2.msra.mxu0 0.0
        %1335 = vmatprep.subr.mxu0 0.0
        %1336 = vmatpush2.msra.mxu0 0.0
        %1337 = vmatprep.subr.mxu0 0.0
        %1338 = vmatpush2.msra.mxu0 0.0
        %1339 = vmatprep.subr.mxu0 0.0
        %1340 = vmatpush2.msra.mxu0 0.0
        %1341 = vmatprep.mubr.f32.mxu0 0.0
        %1342 = vmatmul.mubr.f32.gmra.mxu0 %v1272
        %v1343 = vpop.f32.mrf.mxu0
        %v1344 = vadd.f32 0.0, %v1343
        %v1345 = vpop.f32.mrf.mxu0
        %1346 = vmatprep.mubr.f32.mxu0 0.0
        %1347 = vmatmul.mubr.f32.gmra.mxu0 %v1275
        %v1348 = vpop.f32.mrf.mxu0
        %v1349 = vadd.f32 0.0, %v1348
        %v1350 = vpop.f32.mrf.mxu0
        %1351 = vdwg.mxu0
        %v1352 = vadd.f32 %v1257, %v1344
        %v1353 = vadd.f32 %v1258, %v1349
        %v1354 = vld [vmem:[#allocation4 + $0x2] sm:$0xff]
        %v1355 = vld [vmem:[#allocation4 + $0xa] sm:$0xff]
        %s1356 = scalar_lea.vmem %s7, 144
        %v1357 = vld [vmem:[%s1356] sm:$0xff]
        %v1358 = vld [vmem:[%s1356 + $0x8] sm:$0xff]
        %v1359 = vld [vmem:[%s1356 + $0x10] sm:$0xff]
        %v1360 = vld [vmem:[%s1356 + $0x18] sm:$0xff]
        %v1361 = vld [vmem:[%s1356 + $0x20] sm:$0xff]
        %v1362 = vld [vmem:[%s1356 + $0x28] sm:$0xff]
        %v1363 = vld [vmem:[%s1356 + $0x30] sm:$0xff]
        %v1364 = vld [vmem:[%s1356 + $0x38] sm:$0xff]
        %v1365 = vld [vmem:[%s1356 + $0x40] sm:$0xff]
        %v1367 = vsel %vm859, %v1354, 0
        %v1370 = vsel %vm859, %v1355, 0
        %1372 = vmatprep.subr.mxu0 0.0
        %1373 = vmatpush1.msra.mxu0 0.0
        %1374 = vmatprep.subr.mxu0 0.0
        %1375 = vmatpush1.msra.mxu0 0.0
        %1376 = vmatprep.subr.mxu0 0.0
        %1377 = vmatpush1.msra.mxu0 0.0
        %1378 = vmatprep.subr.mxu0 0.0
        %1379 = vmatpush1.msra.mxu0 0.0
        %1380 = vmatprep.subr.mxu0 0.0
        %1381 = vmatpush1.msra.mxu0 0.0
        %1382 = vmatprep.subr.mxu0 0.0
        %1383 = vmatpush1.msra.mxu0 0.0
        %1384 = vmatprep.subr.mxu0 0.0
        %1385 = vmatpush1.msra.mxu0 0.0
        %1386 = vmatprep.subr.mxu0 0.0
        %1387 = vmatpush1.msra.mxu0 %v1365
        %1388 = vmatprep.subr.mxu0 0.0
        %1389 = vmatpush1.msra.mxu0 %v1364
        %1390 = vmatprep.subr.mxu0 0.0
        %1391 = vmatpush1.msra.mxu0 %v1363
        %1392 = vmatprep.subr.mxu0 0.0
        %1393 = vmatpush1.msra.mxu0 %v1362
        %1394 = vmatprep.subr.mxu0 0.0
        %1395 = vmatpush1.msra.mxu0 %v1361
        %1396 = vmatprep.subr.mxu0 0.0
        %1397 = vmatpush1.msra.mxu0 %v1360
        %1398 = vmatprep.subr.mxu0 0.0
        %1399 = vmatpush1.msra.mxu0 %v1359
        %1400 = vmatprep.subr.mxu0 0.0
        %1401 = vmatpush1.msra.mxu0 %v1358
        %1402 = vmatprep.subr.mxu0 0.0
        %1403 = vmatpush1.msra.mxu0 %v1357
        %1404 = vmatprep.subr.mxu0 0.0
        %1405 = vmatpush2.msra.mxu0 0.0
        %1406 = vmatprep.subr.mxu0 0.0
        %1407 = vmatpush2.msra.mxu0 0.0
        %1408 = vmatprep.subr.mxu0 0.0
        %1409 = vmatpush2.msra.mxu0 0.0
        %1410 = vmatprep.subr.mxu0 0.0
        %1411 = vmatpush2.msra.mxu0 0.0
        %1412 = vmatprep.subr.mxu0 0.0
        %1413 = vmatpush2.msra.mxu0 0.0
        %1414 = vmatprep.subr.mxu0 0.0
        %1415 = vmatpush2.msra.mxu0 0.0
        %1416 = vmatprep.subr.mxu0 0.0
        %1417 = vmatpush2.msra.mxu0 0.0
        %1418 = vmatprep.subr.mxu0 0.0
        %1419 = vmatpush2.msra.mxu0 0.0
        %1420 = vmatprep.subr.mxu0 0.0
        %1421 = vmatpush2.msra.mxu0 0.0
        %1422 = vmatprep.subr.mxu0 0.0
        %1423 = vmatpush2.msra.mxu0 0.0
        %1424 = vmatprep.subr.mxu0 0.0
        %1425 = vmatpush2.msra.mxu0 0.0
        %1426 = vmatprep.subr.mxu0 0.0
        %1427 = vmatpush2.msra.mxu0 0.0
        %1428 = vmatprep.subr.mxu0 0.0
        %1429 = vmatpush2.msra.mxu0 0.0
        %1430 = vmatprep.subr.mxu0 0.0
        %1431 = vmatpush2.msra.mxu0 0.0
        %1432 = vmatprep.subr.mxu0 0.0
        %1433 = vmatpush2.msra.mxu0 0.0
        %1434 = vmatprep.subr.mxu0 0.0
        %1435 = vmatpush2.msra.mxu0 0.0
        %1436 = vmatprep.mubr.f32.mxu0 0.0
        %1437 = vmatmul.mubr.f32.gmra.mxu0 %v1367
        %v1438 = vpop.f32.mrf.mxu0
        %v1439 = vadd.f32 0.0, %v1438
        %v1440 = vpop.f32.mrf.mxu0
        %1441 = vmatprep.mubr.f32.mxu0 0.0
        %1442 = vmatmul.mubr.f32.gmra.mxu0 %v1370
        %v1443 = vpop.f32.mrf.mxu0
        %v1444 = vadd.f32 0.0, %v1443
        %v1445 = vpop.f32.mrf.mxu0
        %1446 = vdwg.mxu0
        %v1447 = vadd.f32 %v1352, %v1439
        %v1448 = vadd.f32 %v1353, %v1444
        %v1449 = vld [vmem:[%s8] sm:$0x1]
        %v1451 = vlaneseq
        %v1452 = vshrl.u32 %v1451, 7
        %v1453 = vsub.s32 0, %v1452
        %v1454 = vrot.slane %v1449, %v1453
        %v1456 = vadd.f32 %v1447, %v1454
        %v1457 = vadd.f32 %v1448, %v1454
        %v1458 = vmax.f32 %v1456, 0.0
        %v1459 = vmax.f32 %v1457, 0.0
        %vm1460 = vcmask 523264
        %1461 = vst.msk [vmem:[%s338] sm:$0xff] %vm1460, %v1458
        %1462 = vst.msk [vmem:[%s338 + $0x8] sm:$0xff] %vm1460, %v1459
        %s1463 = sand.u32 %s230, 1
        %s1464 = scalar_lea.sflag [#allocation6], %s1463
        %s1465 = sand.u32 %s230, 1
        %s1466 = smul.addr %s1465, 16
        %s1467 = scalar_lea.vmem [#allocation5], %s1466
        // Predicated region
        $region57: #{tpu_custom_call.1} parent=55 // pred_check
          %p1468 = pneg %p240
        $region58: #{tpu_custom_call.1} parent=55 // pred_check_branch
          %1470 = sbr.rel (%p1468) target = $region60
        $region59: #{tpu_custom_call.1} parent=55 // pred_region
          %s1472 = ssub.s32 256, 256
          %1473 = vsyncadd %s1464, %s1472
          %s1474 = smul.addr %s23, 2
          %s1475 = smul.addr %s1474, 128
          %s1476 = scalar_lea.hbm %s9, %s1475
          %s1477 = sshll.u32 %s1467, 4
          %s1478 = int_to_ptr.vmem [resolvable:$true] %s1477
          %1483 = dma.vmem_to_hbm [thread:$0]  %s1478, 256, %s1476, %s1464, 128, 128, 8
        $region60: #{tpu_custom_call.1} parent=55 // pred_fallthru
          _
      $region56: #{tpu_custom_call.1} parent=5 // pred_fallthru
        _
      %p1484 = scmp.le.s32.totalorder 2, %s18
      // Predicated region
      $region61: #{tpu_custom_call.1} parent=5 // pred_check
        %p1485 = pneg %p1484
      $region62: #{tpu_custom_call.1} parent=5 // pred_check_branch
        %1487 = sbr.rel (%p1485) target = $region64
      $region63: #{tpu_custom_call.1} parent=5 // pred_region
        %s1488 = ssub.s32 %s18, 2
        // Predicated region
        $region65: #{tpu_custom_call.1} parent=63 // pred_check
          %p1489 = pneg %p246
        $region66: #{tpu_custom_call.1} parent=63 // pred_check_branch
          %1491 = sbr.rel (%p1489) target = $region68
        $region67: #{tpu_custom_call.1} parent=63 // pred_region
          %s1492 = sand.u32 %s231, 1
          %s1493 = scalar_lea.sflag [#allocation6], %s1492
          %s1494 = sand.u32 %s231, 1
          %s1495 = smul.addr %s1494, 16
          %s1496 = scalar_lea.vmem [#allocation5], %s1495
          %1497 = dma.done %s1493, 256
        $region68: #{tpu_custom_call.1} parent=63 // pred_fallthru
          _
      $region64: #{tpu_custom_call.1} parent=5 // pred_fallthru
        _
    $region6: #{tpu_custom_call.1} parent=1 // loop_footer
      %s22 = sadd.s32 1, %s18
    $region7: #{tpu_custom_call.1} parent=1 // loop_footer_branch
      %17 = sbr.rel target = $region3
    $region8: #{tpu_custom_call.1} parent=1 // loop_exit
      _
    %1498 = vsyncpa [#allocation6], 1
    %s1499 = scalar_lea.sflag [#allocation6], 1
    %1500 = vsyncpa %s1499, 1

</llo_original>
